<compile_context>
chip_gen: v5e
topology: v5e:2x2
jax: 0.10.0
libtpu: 0.0.40
codegen_flags: <defaults>
</compile_context>

<pallas_src>
import functools

import numpy as np
import jax
import jax.numpy as jnp
from jax import lax
from jax.experimental import pallas as pl
from jax.experimental.pallas import tpu as pltpu

N_TILE = 20
_HI = lax.Precision.HIGHEST   # only used by the pure-JAX reference


# ----------------------------------------------------------------------------
# Fused Pallas kernel: conv1 -> conv2 -> flatten -> fc0 -> fc1 -> fc2 -> tanh
# (one grid step processes one batch tile of TB samples)
# ----------------------------------------------------------------------------
def _make_fused_kernel(tile_b, s1, max_action):
    def kernel(p1_ref, vel_ref, w1m_ref, b1c_ref, w2c_ref, b2e_ref,
               w0f_ref, w0v_ref, b0_ref, w1f_ref, b1f_ref, w2f_ref, b2f_ref,
               o_ref, y1cat_ref):
        # conv1: single batched MXU matmul, lane-dense output (2, TB*324).
        # bf16 x bf16 -> f32 accumulation (single MXU pass).
        y1 = jnp.dot(w1m_ref[...], p1_ref[0],
                     preferred_element_type=jnp.float32)
        y1 = jnp.maximum(y1 + b1c_ref[...], 0.0)             # (2, TB*S1)

        # Tiny relayout (2, TB*S1) -> (TB, 2*S1) via static scratch stores so
        # conv2 and the fc stack run with M = TB (batched, lane-dense).
        for b in range(tile_b):                               # static unroll, TB small
            sl = slice(b * s1, (b + 1) * s1)
            y1cat_ref[b:b + 1, 0:s1] = y1[0:1, sl]
            y1cat_ref[b:b + 1, s1:2 * s1] = y1[1:2, sl]

        # conv2 as a Toeplitz matmul; bf16 weights / bf16 activations with f32
        # accumulation. Output columns are already in NCHW-flatten order.
        feat = jnp.dot(y1cat_ref[...].astype(jnp.bfloat16), w2c_ref[...],
                       preferred_element_type=jnp.float32)
        feat = jnp.maximum(feat + b2e_ref[...], 0.0)          # (TB, 256)

        vel = vel_ref[0]                                      # (TB, state_dim)
        # fc_0 (velocity x20 tiling folded into w0v) + ReLU
        h = jnp.dot(feat, w0f_ref[...], preferred_element_type=jnp.float32)
        h = h + jnp.dot(vel, w0v_ref[...], preferred_element_type=jnp.float32)
        h = jnp.maximum(h + b0_ref[...], 0.0)                 # (TB, 400)
        # fc_1 + ReLU
        h = jnp.dot(h, w1f_ref[...], preferred_element_type=jnp.float32)
        h = jnp.maximum(h + b1f_ref[...], 0.0)                # (TB, 300)
        # fc_2 + tanh * max_action
        a = jnp.dot(h, w2f_ref[...], preferred_element_type=jnp.float32)
        a = jnp.tanh(a + b2f_ref[...])
        o_ref[0] = (max_action * a).astype(o_ref.dtype)

    return kernel


# ----------------------------------------------------------------------------
# Parameter init (torch-equivalent layouts) and one-time packing
# ----------------------------------------------------------------------------
def xavier_normal(key, shape):
    fan_in = shape[1] * shape[2] * shape[3]
    fan_out = shape[0] * shape[2] * shape[3]
    std = (2.0 / (fan_in + fan_out)) ** 0.5
    return std * jax.random.normal(key, shape, jnp.float32)


def kaiming_normal(key, shape):
    std = (2.0 / shape[1]) ** 0.5
    return std * jax.random.normal(key, shape, jnp.float32)


def init_actor_params(key, channel_num, state_dim, action_dim):
    ks = jax.random.split(key, 5)
    feat_dim = 8 * 8 * 4 + N_TILE * state_dim
    return {
        "conv1_w": xavier_normal(ks[0], (2, channel_num, 8, 8)),
        "conv1_b": jnp.zeros((2,), jnp.float32),
        "conv2_w": xavier_normal(ks[1], (4, 2, 4, 4)),
        "conv2_b": jnp.zeros((4,), jnp.float32),
        "fc0_w": kaiming_normal(ks[2], (400, feat_dim)),
        "fc0_b": jnp.zeros((400,), jnp.float32),
        "fc1_w": kaiming_normal(ks[3], (300, 400)),
        "fc1_b": jnp.zeros((300,), jnp.float32),
        "fc2_w": kaiming_normal(ks[4], (action_dim, 300)),
        "fc2_b": jnp.zeros((action_dim,), jnp.float32),
    }


def pack_actor_params(raw, channel_num, state_dim, image_hw=42):
    """One-time host-side repacking into kernel-friendly layouts."""
    C, H, W = channel_num, image_hw, image_hw
    OH1 = (H - 8) // 2 + 1          # 18
    OW1 = (W - 8) // 2 + 1          # 18
    S1 = OH1 * OW1                  # 324
    OH2 = (OH1 - 4) // 2 + 1        # 8
    OW2 = (OW1 - 4) // 2 + 1        # 8
    F2 = 4 * OH2 * OW2              # 256

    # Discover (order-robustly) the patch-feature layout of conv_general_dilated_patches.
    probe = lax.conv_general_dilated_patches(
        jnp.arange(C * H * W, dtype=jnp.float32).reshape(1, C, H, W),
        (8, 8), (2, 2), "VALID")
    flat = np.asarray(probe)[0, :, 0, 0].round().astype(np.int64)   # (C*64,)
    ci = flat // (H * W)
    kh = (flat % (H * W)) // W
    kw = flat % W

    w1 = np.asarray(raw["conv1_w"], np.float32)                      # (2, C, 8, 8)
    w1m = (w1[:, ci, kh, kw] / 255.0).astype(np.float32)             # (2, C*64), /255 folded
    b1c = np.asarray(raw["conv1_b"], np.float32).reshape(2, 1)

    # conv2 as one dense Toeplitz matmul: rows = cin*324 + conv1 spatial idx,
    # cols = co*64 + oh*8 + ow  (== NCHW flatten order of the (4,8,8) map).
    w2 = np.asarray(raw["conv2_w"], np.float32)                      # (4, 2, 4, 4)
    w2c = np.zeros((2 * S1, F2), np.float32)
    for co in range(4):
        for cin in range(2):
            for kh2 in range(4):
                for kw2 in range(4):
                    for oh in range(OH2):
                        for ow in range(OW2):
                            w2c[cin * S1 + (2 * oh + kh2) * OW1 + (2 * ow + kw2),
                                co * OH2 * OW2 + oh * OW2 + ow] = w2[co, cin, kh2, kw2]
    b2e = np.repeat(np.asarray(raw["conv2_b"], np.float32), OH2 * OW2).reshape(1, F2)

    fc0_w = np.asarray(raw["fc0_w"], np.float32)                     # (400, 256+20*S)
    w0f = fc0_w[:, :F2].T.copy()                                     # (256, 400)
    # Fold the x20 velocity tiling into the fc0 velocity block (exact).
    w0v = fc0_w[:, F2:].reshape(400, N_TILE, state_dim).sum(axis=1).T.copy()  # (S, 400)
    b0 = np.asarray(raw["fc0_b"], np.float32).reshape(1, -1)
    w1f = np.asarray(raw["fc1_w"], np.float32).T.copy()              # (400, 300)
    b1f = np.asarray(raw["fc1_b"], np.float32).reshape(1, -1)
    w2f = np.asarray(raw["fc2_w"], np.float32).T.copy()              # (300, A)
    b2f = np.asarray(raw["fc2_b"], np.float32).reshape(1, -1)

    return {
        "w1m": jnp.asarray(w1m, jnp.bfloat16),   # bf16: single MXU pass for conv1
        "b1c": jnp.asarray(b1c, jnp.float32),
        "w2c": jnp.asarray(w2c, jnp.bfloat16),   # bf16 Toeplitz: ~2x less weight DMA
        "b2e": jnp.asarray(b2e, jnp.float32),
        "w0f": jnp.asarray(w0f, jnp.float32),
        "w0v": jnp.asarray(w0v, jnp.float32),
        "b0": jnp.asarray(b0, jnp.float32),
        "w1f": jnp.asarray(w1f, jnp.float32),
        "b1f": jnp.asarray(b1f, jnp.float32),
        "w2f": jnp.asarray(w2f, jnp.float32),
        "b2f": jnp.asarray(b2f, jnp.float32),
    }


# ----------------------------------------------------------------------------
# Forward pass: one XLA im2col op + one fused, batch-gridded pallas_call
# ----------------------------------------------------------------------------
def actor_forward(packed, image, velocity, max_action, tile_b=8):
    B, C, H, W = image.shape
    OH1 = (H - 8) // 2 + 1
    OW1 = (W - 8) // 2 + 1
    S1 = OH1 * OW1                                  # 324
    TB = min(tile_b, B)
    num_tiles = pl.cdiv(B, TB)
    B_pad = num_tiles * TB

    # conv1 im2col (single fused XLA op), handed to the kernel in bf16 to halve
    # the patches HBM round trip.  /255 is folded into the packed conv1 weights.
    # TODO(synk): do the im2col inside the kernel (strided-slice direct conv).
    x = image.astype(jnp.bfloat16)
    p1 = lax.conv_general_dilated_patches(x, (8, 8), (2, 2), "VALID")
    p1 = p1.reshape(B, C * 64, S1)
    vel = velocity.reshape(B, -1).astype(jnp.float32)
    S = vel.shape[1]
    if B_pad != B:
        p1 = jnp.pad(p1, ((0, B_pad - B), (0, 0), (0, 0)))
        vel = jnp.pad(vel, ((0, B_pad - B), (0, 0)))

    # Lane-dense layout: one (192, TB*324) slab per batch tile.
    p1 = p1.reshape(num_tiles, TB, C * 64, S1).transpose(0, 2, 1, 3)
    p1 = p1.reshape(num_tiles, C * 64, TB * S1)
    vel = vel.reshape(num_tiles, TB, S)

    A = packed["w2f"].shape[1]
    weight_keys = ("w1m", "b1c", "w2c", "b2e", "w0f", "w0v", "b0",
                   "w1f", "b1f", "w2f", "b2f")
    args = (p1, vel) + tuple(packed[k] for k in weight_keys)

    def tile_spec(shape):
        n = len(shape)
        return pl.BlockSpec((1,) + tuple(shape[1:]),
                            lambda i, _n=n: (i,) + (0,) * (_n - 1))

    def const_spec(shape):
        n = len(shape)
        return pl.BlockSpec(tuple(shape), lambda i, _n=n: (0,) * _n)

    in_specs = [tile_spec(p1.shape), tile_spec(vel.shape)]
    in_specs += [const_spec(packed[k].shape) for k in weight_keys]

    flops = 2 * B_pad * (2 * (C * 64) * S1 + (2 * S1) * 256
                         + 256 * 400 + S * 400 + 400 * 300 + 300 * A)
    bytes_accessed = int(
        p1.size * 2 + vel.size * 4 + B_pad * A * 4
        + sum(int(np.prod(packed[k].shape)) * packed[k].dtype.itemsize
              for k in weight_keys))
    cost = pl.CostEstimate(flops=int(flops), transcendentals=int(B_pad * A),
                           bytes_accessed=bytes_accessed)

    out = pl.pallas_call(
        _make_fused_kernel(TB, S1, float(max_action)),
        out_shape=jax.ShapeDtypeStruct((num_tiles, TB, A), jnp.float32),
        grid=(num_tiles,),
        in_specs=in_specs,
        out_specs=pl.BlockSpec((1, TB, A), lambda i: (i, 0, 0)),
        scratch_shapes=[pltpu.VMEM((TB, 2 * S1), jnp.float32)],
        compiler_params=pltpu.CompilerParams(
            dimension_semantics=("parallel",)),
        cost_estimate=cost,
    )(*args)
    return out.reshape(B_pad, A)[:B]


# ----------------------------------------------------------------------------
# Pure-JAX reference (mirrors the PyTorch module) for correctness checking
# ----------------------------------------------------------------------------
def reference_forward(raw, image, velocity, max_action):
    dn = ("NCHW", "OIHW", "NCHW")
    B = image.shape[0]
    x = image.astype(jnp.float32) / 255.0
    y = lax.conv_general_dilated(x, raw["conv1_w"], (2, 2), "VALID",
                                 dimension_numbers=dn, precision=_HI)
    y = jnp.maximum(y + raw["conv1_b"].reshape(1, -1, 1, 1), 0.0)
    y = lax.conv_general_dilated(y, raw["conv2_w"], (2, 2), "VALID",
                                 dimension_numbers=dn, precision=_HI)
    y = jnp.maximum(y + raw["conv2_b"].reshape(1, -1, 1, 1), 0.0)
    feat = y.reshape(B, -1)
    vel = jnp.tile(velocity.reshape(B, -1), (1, N_TILE))
    h = jnp.concatenate([feat, vel], axis=1)
    h = jnp.maximum(jnp.dot(h, raw["fc0_w"].T, precision=_HI) + raw["fc0_b"], 0.0)
    h = jnp.maximum(jnp.dot(h, raw["fc1_w"].T, precision=_HI) + raw["fc1_b"], 0.0)
    return max_action * jnp.tanh(jnp.dot(h, raw["fc2_w"].T, precision=_HI) + raw["fc2_b"])


if __name__ == "__main__":
    # Spatial size 42x42 is fixed by the architecture (conv stack must give 8x8x4).
    channel_num = 3
    state_dim = 3
    action_dim = 2
    max_action = 1.0
    batch = 2

    key = jax.random.PRNGKey(0)
    k_param, k_img, k_vel = jax.random.split(key, 3)

    raw_params = init_actor_params(k_param, channel_num, state_dim, action_dim)
    packed_params = pack_actor_params(raw_params, channel_num, state_dim, image_hw=42)

    image = jax.random.uniform(
        k_img, (batch, channel_num, 42, 42), jnp.float32, minval=0.0, maxval=255.0)
    velocity = jax.random.normal(k_vel, (batch, state_dim), jnp.float32)

    fwd = jax.jit(functools.partial(actor_forward, max_action=max_action))
    action = jax.block_until_ready(fwd(packed_params, image, velocity))
    ref = jax.block_until_ready(reference_forward(raw_params, image, velocity, max_action))

    assert action.shape == (batch, action_dim)
    assert bool(jnp.all(jnp.isfinite(action)))
    assert bool(jnp.all(jnp.abs(action) <= max_action + 1e-5))
    # Tolerance reflects bf16 patches / bf16 Toeplitz / default-precision MXU
    # passes vs. the f32-HIGHEST reference (review item 4: precision relaxed).
    assert bool(jnp.allclose(action, ref, atol=3e-2, rtol=3e-2)), (action, ref)
    print("KERNEL_OK")
</pallas_src>

<mosaic_0001>
module attributes {stable_mosaic.version = 11 : i64} {
  func.func @kernel(%arg0: i32, %arg1: memref<1x192x648xbf16, #tpu.memory_space<vmem>>, %arg2: memref<1x2x3xf32, #tpu.memory_space<vmem>>, %arg3: memref<2x192xbf16, #tpu.memory_space<vmem>>, %arg4: memref<2x1xf32, #tpu.memory_space<vmem>>, %arg5: memref<648x256xbf16, #tpu.memory_space<vmem>>, %arg6: memref<1x256xf32, #tpu.memory_space<vmem>>, %arg7: memref<256x400xf32, #tpu.memory_space<vmem>>, %arg8: memref<3x400xf32, #tpu.memory_space<vmem>>, %arg9: memref<1x400xf32, #tpu.memory_space<vmem>>, %arg10: memref<400x300xf32, #tpu.memory_space<vmem>>, %arg11: memref<1x300xf32, #tpu.memory_space<vmem>>, %arg12: memref<300x2xf32, #tpu.memory_space<vmem>>, %arg13: memref<1x2xf32, #tpu.memory_space<vmem>>, %arg14: memref<1x2x2xf32, #tpu.memory_space<vmem>>, %arg15: memref<2x648xf32, #tpu.memory_space<vmem>>) attributes {dimension_semantics = [#tpu.dimension_semantics<parallel>], iteration_bounds = array<i64: 1>, scalar_prefetch = 0 : i64, scratch_operands = 1 : i64, tpu.core_type = #tpu.core_type<tc>, window_params = [{transform_indices = @transform_0, window_bounds = array<i64: 1, 192, 648>}, {transform_indices = @transform_1, window_bounds = array<i64: 1, 2, 3>}, {pipeline_mode = #tpu.pipeline_mode<synchronous>, transform_indices = @transform_2, window_bounds = array<i64: 2, 192>}, {pipeline_mode = #tpu.pipeline_mode<synchronous>, transform_indices = @transform_3, window_bounds = array<i64: 2, 1>}, {pipeline_mode = #tpu.pipeline_mode<synchronous>, transform_indices = @transform_4, window_bounds = array<i64: 648, 256>}, {pipeline_mode = #tpu.pipeline_mode<synchronous>, transform_indices = @transform_5, window_bounds = array<i64: 1, 256>}, {pipeline_mode = #tpu.pipeline_mode<synchronous>, transform_indices = @transform_6, window_bounds = array<i64: 256, 400>}, {pipeline_mode = #tpu.pipeline_mode<synchronous>, transform_indices = @transform_7, window_bounds = array<i64: 3, 400>}, {pipeline_mode = #tpu.pipeline_mode<synchronous>, transform_indices = @transform_8, window_bounds = array<i64: 1, 400>}, {pipeline_mode = #tpu.pipeline_mode<synchronous>, transform_indices = @transform_9, window_bounds = array<i64: 400, 300>}, {pipeline_mode = #tpu.pipeline_mode<synchronous>, transform_indices = @transform_10, window_bounds = array<i64: 1, 300>}, {pipeline_mode = #tpu.pipeline_mode<synchronous>, transform_indices = @transform_11, window_bounds = array<i64: 300, 2>}, {pipeline_mode = #tpu.pipeline_mode<synchronous>, transform_indices = @transform_12, window_bounds = array<i64: 1, 2>}, {transform_indices = @transform_13, window_bounds = array<i64: 1, 2, 2>}]} {
    %c0 = arith.constant 0 : index
    %c0_0 = arith.constant 0 : index
    %0 = vector.load %arg3[%c0, %c0_0] : memref<2x192xbf16, #tpu.memory_space<vmem>>, vector<2x192xbf16>
    %c0_1 = arith.constant 0 : index
    %c0_2 = arith.constant 0 : index
    %c0_3 = arith.constant 0 : index
    %1 = vector.load %arg1[%c0_1, %c0_2, %c0_3] : memref<1x192x648xbf16, #tpu.memory_space<vmem>>, vector<1x192x648xbf16>
    %2 = vector.shape_cast %1 : vector<1x192x648xbf16> to vector<192x648xbf16>
    %cst = arith.constant dense<0.000000e+00> : vector<2x648xf32>
    %3 = tpu.matmul %0, %2, %cst {dimension_numbers = #tpu.dot_dimension_numbers<[1], [0], [0], [1], [0, 0, 1, 1], [], []>} : vector<2x192xbf16>, vector<192x648xbf16>, vector<2x648xf32> -> vector<2x648xf32>
    %c0_4 = arith.constant 0 : index
    %c0_5 = arith.constant 0 : index
    %4 = vector.load %arg4[%c0_4, %c0_5] : memref<2x1xf32, #tpu.memory_space<vmem>>, vector<2x1xf32>
    %5 = vector.broadcast %4 : vector<2x1xf32> to vector<2x648xf32>
    %6 = arith.addf %3, %5 : vector<2x648xf32>
    %cst_6 = arith.constant 0.000000e+00 : f32
    %7 = vector.broadcast %cst_6 : f32 to vector<2x648xf32>
    %8 = arith.maximumf %6, %7 : vector<2x648xf32>
    %9 = vector.extract_strided_slice %8 {offsets = [0, 0], sizes = [1, 324], strides = [1, 1]} : vector<2x648xf32> to vector<1x324xf32>
    %c0_7 = arith.constant 0 : index
    %c0_8 = arith.constant 0 : index
    %10 = vector.load %arg15[%c0_7, %c0_8] : memref<2x648xf32, #tpu.memory_space<vmem>>, vector<1x324xf32>
    tpu.vector_store %arg15[%c0_7, %c0_8], %9 {strides = array<i32>} : memref<2x648xf32, #tpu.memory_space<vmem>>, vector<1x324xf32>,
    %11 = vector.extract_strided_slice %8 {offsets = [1, 0], sizes = [1, 324], strides = [1, 1]} : vector<2x648xf32> to vector<1x324xf32>
    %c0_9 = arith.constant 0 : index
    %c324 = arith.constant 324 : index
    %12 = vector.load %arg15[%c0_9, %c324] : memref<2x648xf32, #tpu.memory_space<vmem>>, vector<1x324xf32>
    tpu.vector_store %arg15[%c0_9, %c324], %11 {strides = array<i32>} : memref<2x648xf32, #tpu.memory_space<vmem>>, vector<1x324xf32>,
    %13 = vector.extract_strided_slice %8 {offsets = [0, 324], sizes = [1, 324], strides = [1, 1]} : vector<2x648xf32> to vector<1x324xf32>
    %c1 = arith.constant 1 : index
    %c0_10 = arith.constant 0 : index
    %14 = vector.load %arg15[%c1, %c0_10] : memref<2x648xf32, #tpu.memory_space<vmem>>, vector<1x324xf32>
    tpu.vector_store %arg15[%c1, %c0_10], %13 {strides = array<i32>} : memref<2x648xf32, #tpu.memory_space<vmem>>, vector<1x324xf32>,
    %15 = vector.extract_strided_slice %8 {offsets = [1, 324], sizes = [1, 324], strides = [1, 1]} : vector<2x648xf32> to vector<1x324xf32>
    %c1_11 = arith.constant 1 : index
    %c324_12 = arith.constant 324 : index
    %16 = vector.load %arg15[%c1_11, %c324_12] : memref<2x648xf32, #tpu.memory_space<vmem>>, vector<1x324xf32>
    tpu.vector_store %arg15[%c1_11, %c324_12], %15 {strides = array<i32>} : memref<2x648xf32, #tpu.memory_space<vmem>>, vector<1x324xf32>,
    %c0_13 = arith.constant 0 : index
    %c0_14 = arith.constant 0 : index
    %17 = vector.load %arg15[%c0_13, %c0_14] : memref<2x648xf32, #tpu.memory_space<vmem>>, vector<2x648xf32>
    %18 = arith.truncf %17 : vector<2x648xf32> to vector<2x648xbf16>
    %c0_15 = arith.constant 0 : index
    %c0_16 = arith.constant 0 : index
    %19 = vector.load %arg5[%c0_15, %c0_16] : memref<648x256xbf16, #tpu.memory_space<vmem>>, vector<648x256xbf16>
    %cst_17 = arith.constant dense<0.000000e+00> : vector<2x256xf32>
    %20 = tpu.matmul %18, %19, %cst_17 {dimension_numbers = #tpu.dot_dimension_numbers<[1], [0], [0], [1], [0, 0, 1, 1], [], []>} : vector<2x648xbf16>, vector<648x256xbf16>, vector<2x256xf32> -> vector<2x256xf32>
    %c0_18 = arith.constant 0 : index
    %c0_19 = arith.constant 0 : index
    %21 = vector.load %arg6[%c0_18, %c0_19] : memref<1x256xf32, #tpu.memory_space<vmem>>, vector<1x256xf32>
    %22 = vector.broadcast %21 : vector<1x256xf32> to vector<2x256xf32>
    %23 = arith.addf %20, %22 : vector<2x256xf32>
    %cst_20 = arith.constant 0.000000e+00 : f32
    %24 = vector.broadcast %cst_20 : f32 to vector<2x256xf32>
    %25 = arith.maximumf %23, %24 : vector<2x256xf32>
    %c0_21 = arith.constant 0 : index
    %c0_22 = arith.constant 0 : index
    %c0_23 = arith.constant 0 : index
    %26 = vector.load %arg2[%c0_21, %c0_22, %c0_23] : memref<1x2x3xf32, #tpu.memory_space<vmem>>, vector<1x2x3xf32>
    %27 = vector.shape_cast %26 : vector<1x2x3xf32> to vector<2x3xf32>
    %c0_24 = arith.constant 0 : index
    %c0_25 = arith.constant 0 : index
    %28 = vector.load %arg7[%c0_24, %c0_25] : memref<256x400xf32, #tpu.memory_space<vmem>>, vector<256x400xf32>
    %cst_26 = arith.constant dense<0.000000e+00> : vector<2x400xf32>
    %29 = tpu.matmul %25, %28, %cst_26 {dimension_numbers = #tpu.dot_dimension_numbers<[1], [0], [0], [1], [0, 0, 1, 1], [], []>} : vector<2x256xf32>, vector<256x400xf32>, vector<2x400xf32> -> vector<2x400xf32>
    %c0_27 = arith.constant 0 : index
    %c0_28 = arith.constant 0 : index
    %30 = vector.load %arg8[%c0_27, %c0_28] : memref<3x400xf32, #tpu.memory_space<vmem>>, vector<3x400xf32>
    %cst_29 = arith.constant dense<0.000000e+00> : vector<2x400xf32>
    %31 = tpu.matmul %27, %30, %cst_29 {dimension_numbers = #tpu.dot_dimension_numbers<[1], [0], [0], [1], [0, 0, 1, 1], [], []>} : vector<2x3xf32>, vector<3x400xf32>, vector<2x400xf32> -> vector<2x400xf32>
    %32 = arith.addf %29, %31 : vector<2x400xf32>
    %c0_30 = arith.constant 0 : index
    %c0_31 = arith.constant 0 : index
    %33 = vector.load %arg9[%c0_30, %c0_31] : memref<1x400xf32, #tpu.memory_space<vmem>>, vector<1x400xf32>
    %34 = vector.broadcast %33 : vector<1x400xf32> to vector<2x400xf32>
    %35 = arith.addf %32, %34 : vector<2x400xf32>
    %cst_32 = arith.constant 0.000000e+00 : f32
    %36 = vector.broadcast %cst_32 : f32 to vector<2x400xf32>
    %37 = arith.maximumf %35, %36 : vector<2x400xf32>
    %c0_33 = arith.constant 0 : index
    %c0_34 = arith.constant 0 : index
    %38 = vector.load %arg10[%c0_33, %c0_34] : memref<400x300xf32, #tpu.memory_space<vmem>>, vector<400x300xf32>
    %cst_35 = arith.constant dense<0.000000e+00> : vector<2x300xf32>
    %39 = tpu.matmul %37, %38, %cst_35 {dimension_numbers = #tpu.dot_dimension_numbers<[1], [0], [0], [1], [0, 0, 1, 1], [], []>} : vector<2x400xf32>, vector<400x300xf32>, vector<2x300xf32> -> vector<2x300xf32>
    %c0_36 = arith.constant 0 : index
    %c0_37 = arith.constant 0 : index
    %40 = vector.load %arg11[%c0_36, %c0_37] : memref<1x300xf32, #tpu.memory_space<vmem>>, vector<1x300xf32>
    %41 = vector.broadcast %40 : vector<1x300xf32> to vector<2x300xf32>
    %42 = arith.addf %39, %41 : vector<2x300xf32>
    %cst_38 = arith.constant 0.000000e+00 : f32
    %43 = vector.broadcast %cst_38 : f32 to vector<2x300xf32>
    %44 = arith.maximumf %42, %43 : vector<2x300xf32>
    %c0_39 = arith.constant 0 : index
    %c0_40 = arith.constant 0 : index
    %45 = vector.load %arg12[%c0_39, %c0_40] : memref<300x2xf32, #tpu.memory_space<vmem>>, vector<300x2xf32>
    %cst_41 = arith.constant dense<0.000000e+00> : vector<2x2xf32>
    %46 = tpu.matmul %44, %45, %cst_41 {dimension_numbers = #tpu.dot_dimension_numbers<[1], [0], [0], [1], [0, 0, 1, 1], [], []>} : vector<2x300xf32>, vector<300x2xf32>, vector<2x2xf32> -> vector<2x2xf32>
    %c0_42 = arith.constant 0 : index
    %c0_43 = arith.constant 0 : index
    %47 = vector.load %arg13[%c0_42, %c0_43] : memref<1x2xf32, #tpu.memory_space<vmem>>, vector<1x2xf32>
    %48 = vector.broadcast %47 : vector<1x2xf32> to vector<2x2xf32>
    %49 = arith.addf %46, %48 : vector<2x2xf32>
    %50 = math.tanh %49 : vector<2x2xf32>
    %cst_44 = arith.constant 1.000000e+00 : f32
    %51 = vector.broadcast %cst_44 : f32 to vector<2x2xf32>
    %52 = arith.mulf %51, %50 : vector<2x2xf32>
    %c0_45 = arith.constant 0 : index
    %c0_46 = arith.constant 0 : index
    %c0_47 = arith.constant 0 : index
    %53 = vector.load %arg14[%c0_45, %c0_46, %c0_47] : memref<1x2x2xf32, #tpu.memory_space<vmem>>, vector<1x2x2xf32>
    %54 = vector.shape_cast %53 : vector<1x2x2xf32> to vector<2x2xf32>
    %55 = vector.shape_cast %52 : vector<2x2xf32> to vector<1x2x2xf32>
    tpu.vector_store %arg14[%c0_45, %c0_46, %c0_47], %55 {strides = array<i32>} : memref<1x2x2xf32, #tpu.memory_space<vmem>>, vector<1x2x2xf32>,
    return
  }
  func.func @transform_0(%arg0: i32) -> (i32, i32, i32) {
    %c0_i32 = arith.constant 0 : i32
    %c0_i32_0 = arith.constant 0 : i32
    %c0_i32_1 = arith.constant 0 : i32
    return %arg0, %c0_i32, %c0_i32_0 : i32, i32, i32
  }
  func.func @transform_1(%arg0: i32) -> (i32, i32, i32) {
    %c0_i32 = arith.constant 0 : i32
    %c0_i32_0 = arith.constant 0 : i32
    %c0_i32_1 = arith.constant 0 : i32
    return %arg0, %c0_i32, %c0_i32_0 : i32, i32, i32
  }
  func.func @transform_2(%arg0: i32) -> (i32, i32) {
    %c0_i32 = arith.constant 0 : i32
    %c0_i32_0 = arith.constant 0 : i32
    %c0_i32_1 = arith.constant 0 : i32
    return %c0_i32, %c0_i32_0 : i32, i32
  }
  func.func @transform_3(%arg0: i32) -> (i32, i32) {
    %c0_i32 = arith.constant 0 : i32
    %c0_i32_0 = arith.constant 0 : i32
    %c0_i32_1 = arith.constant 0 : i32
    return %c0_i32, %c0_i32_0 : i32, i32
  }
  func.func @transform_4(%arg0: i32) -> (i32, i32) {
    %c0_i32 = arith.constant 0 : i32
    %c0_i32_0 = arith.constant 0 : i32
    %c0_i32_1 = arith.constant 0 : i32
    return %c0_i32, %c0_i32_0 : i32, i32
  }
  func.func @transform_5(%arg0: i32) -> (i32, i32) {
    %c0_i32 = arith.constant 0 : i32
    %c0_i32_0 = arith.constant 0 : i32
    %c0_i32_1 = arith.constant 0 : i32
    return %c0_i32, %c0_i32_0 : i32, i32
  }
  func.func @transform_6(%arg0: i32) -> (i32, i32) {
    %c0_i32 = arith.constant 0 : i32
    %c0_i32_0 = arith.constant 0 : i32
    %c0_i32_1 = arith.constant 0 : i32
    return %c0_i32, %c0_i32_0 : i32, i32
  }
  func.func @transform_7(%arg0: i32) -> (i32, i32) {
    %c0_i32 = arith.constant 0 : i32
    %c0_i32_0 = arith.constant 0 : i32
    %c0_i32_1 = arith.constant 0 : i32
    return %c0_i32, %c0_i32_0 : i32, i32
  }
  func.func @transform_8(%arg0: i32) -> (i32, i32) {
    %c0_i32 = arith.constant 0 : i32
    %c0_i32_0 = arith.constant 0 : i32
    %c0_i32_1 = arith.constant 0 : i32
    return %c0_i32, %c0_i32_0 : i32, i32
  }
  func.func @transform_9(%arg0: i32) -> (i32, i32) {
    %c0_i32 = arith.constant 0 : i32
    %c0_i32_0 = arith.constant 0 : i32
    %c0_i32_1 = arith.constant 0 : i32
    return %c0_i32, %c0_i32_0 : i32, i32
  }
  func.func @transform_10(%arg0: i32) -> (i32, i32) {
    %c0_i32 = arith.constant 0 : i32
    %c0_i32_0 = arith.constant 0 : i32
    %c0_i32_1 = arith.constant 0 : i32
    return %c0_i32, %c0_i32_0 : i32, i32
  }
  func.func @transform_11(%arg0: i32) -> (i32, i32) {
    %c0_i32 = arith.constant 0 : i32
    %c0_i32_0 = arith.constant 0 : i32
    %c0_i32_1 = arith.constant 0 : i32
    return %c0_i32, %c0_i32_0 : i32, i32
  }
  func.func @transform_12(%arg0: i32) -> (i32, i32) {
    %c0_i32 = arith.constant 0 : i32
    %c0_i32_0 = arith.constant 0 : i32
    %c0_i32_1 = arith.constant 0 : i32
    return %c0_i32, %c0_i32_0 : i32, i32
  }
  func.func @transform_13(%arg0: i32) -> (i32, i32, i32) {
    %c0_i32 = arith.constant 0 : i32
    %c0_i32_0 = arith.constant 0 : i32
    %c0_i32_1 = arith.constant 0 : i32
    return %arg0, %c0_i32, %c0_i32_0 : i32, i32, i32
  }
}

</mosaic_0001>

<llo_original>
// kernel: actor_forward.1
$region0: #{actor_forward.1}
  #allocation0 [shape = 'u32[]', space=smem, size = 0x4, offset = 0x4, fixed_abs, tag = 'smem constant byte address 0x4 - core index']
  #allocation1 [shape = 'u32[72,128]{1,0:T(1,128)}', space=vmem, size = 0x9000, scoped, tag = 'internal scratch']
  #allocation2 [shape = 'f32[2,648]{1,0:T(2,128)}', space=vmem, size = 0x1800, scoped, tag = 'scratch operand']
  %s0 = inlined_call_operand.vmem [shape: bf16[1,192,648], index: 0, kind: input, shape index: {}]
  %s1 = inlined_call_operand.vmem [shape: f32[1,2,3], index: 1, kind: input, shape index: {}]
  %s2 = inlined_call_operand.vmem [shape: bf16[2,192], index: 2, kind: input, shape index: {}]
  %s3 = inlined_call_operand.vmem [shape: f32[2,1], index: 3, kind: input, shape index: {}]
  %s4 = inlined_call_operand.vmem [shape: bf16[648,256], index: 4, kind: input, shape index: {}]
  %s5 = inlined_call_operand.vmem [shape: f32[1,256], index: 5, kind: input, shape index: {}]
  %s6 = inlined_call_operand.vmem [shape: f32[256,400], index: 6, kind: input, shape index: {}]
  %s7 = inlined_call_operand.vmem [shape: f32[3,400], index: 7, kind: input, shape index: {}]
  %s8 = inlined_call_operand.vmem [shape: f32[1,400], index: 8, kind: input, shape index: {}]
  %s9 = inlined_call_operand.vmem [shape: f32[400,300], index: 9, kind: input, shape index: {}]
  %s10 = inlined_call_operand.vmem [shape: f32[1,300], index: 10, kind: input, shape index: {}]
  %s11 = inlined_call_operand.vmem [shape: f32[300,2], index: 11, kind: input, shape index: {}]
  %s12 = inlined_call_operand.vmem [shape: f32[1,2], index: 12, kind: input, shape index: {}]
  %s13 = inlined_call_operand.hbm [shape: f32[1,2,2], index: 13, kind: output, shape index: {}]
  %s14 = sld [smem:[#allocation0]]
  $region62: #{actor_forward.1} parent=0
    _
  %s16 = ssub.s32 1, %s14
  %s17 = scalar_select 0, %s16, %s14
  $region1: #{actor_forward.1} parent=0
    #allocation3 [shape = 'u8[1024]{0}', space=vmem, size = 0x400, scoped, tag = 'output window, operand 0, single buffered']
    #allocation4 [shape = 's32[1]{0}', space=sflag, size = 0x4, scoped, tag = 'scoped memory for actor_forward.1']
    %18 = vsyncpa [#allocation4], 0
    // Predicated region
    $region2: #{actor_forward.1} parent=1 // pred_check
      _
    $region3: #{actor_forward.1} parent=1 // pred_check_branch
      %20 = sbr.rel (0) target = $region5
    $region4: #{actor_forward.1} parent=1 // pred_region
      _
    $region5: #{actor_forward.1} parent=1 // pred_fallthru
      _
    // Predicated region
    $region6: #{actor_forward.1} parent=1 // pred_check
      _
    $region7: #{actor_forward.1} parent=1 // pred_check_branch
      %22 = sbr.rel (0) target = $region9
    $region8: #{actor_forward.1} parent=1 // pred_region
      _
    $region9: #{actor_forward.1} parent=1 // pred_fallthru
      _
    // Predicated region
    $region10: #{actor_forward.1} parent=1 // pred_check
      _
    $region11: #{actor_forward.1} parent=1 // pred_check_branch
      %24 = sbr.rel (0) target = $region13
    $region12: #{actor_forward.1} parent=1 // pred_region
      _
    $region13: #{actor_forward.1} parent=1 // pred_fallthru
      _
    // Predicated region
    $region14: #{actor_forward.1} parent=1 // pred_check
      _
    $region15: #{actor_forward.1} parent=1 // pred_check_branch
      %26 = sbr.rel (0) target = $region17
    $region16: #{actor_forward.1} parent=1 // pred_region
      _
    $region17: #{actor_forward.1} parent=1 // pred_fallthru
      _
    // Predicated region
    $region18: #{actor_forward.1} parent=1 // pred_check
      _
    $region19: #{actor_forward.1} parent=1 // pred_check_branch
      %28 = sbr.rel (0) target = $region21
    $region20: #{actor_forward.1} parent=1 // pred_region
      _
    $region21: #{actor_forward.1} parent=1 // pred_fallthru
      _
    // Predicated region
    $region22: #{actor_forward.1} parent=1 // pred_check
      _
    $region23: #{actor_forward.1} parent=1 // pred_check_branch
      %30 = sbr.rel (0) target = $region25
    $region24: #{actor_forward.1} parent=1 // pred_region
      _
    $region25: #{actor_forward.1} parent=1 // pred_fallthru
      _
    // Predicated region
    $region26: #{actor_forward.1} parent=1 // pred_check
      _
    $region27: #{actor_forward.1} parent=1 // pred_check_branch
      %32 = sbr.rel (0) target = $region29
    $region28: #{actor_forward.1} parent=1 // pred_region
      _
    $region29: #{actor_forward.1} parent=1 // pred_fallthru
      _
    // Predicated region
    $region30: #{actor_forward.1} parent=1 // pred_check
      _
    $region31: #{actor_forward.1} parent=1 // pred_check_branch
      %34 = sbr.rel (0) target = $region33
    $region32: #{actor_forward.1} parent=1 // pred_region
      _
    $region33: #{actor_forward.1} parent=1 // pred_fallthru
      _
    // Predicated region
    $region34: #{actor_forward.1} parent=1 // pred_check
      _
    $region35: #{actor_forward.1} parent=1 // pred_check_branch
      %36 = sbr.rel (0) target = $region37
    $region36: #{actor_forward.1} parent=1 // pred_region
      _
    $region37: #{actor_forward.1} parent=1 // pred_fallthru
      _
    // Predicated region
    $region38: #{actor_forward.1} parent=1 // pred_check
      _
    $region39: #{actor_forward.1} parent=1 // pred_check_branch
      %38 = sbr.rel (0) target = $region41
    $region40: #{actor_forward.1} parent=1 // pred_region
      _
    $region41: #{actor_forward.1} parent=1 // pred_fallthru
      _
    // Predicated region
    $region42: #{actor_forward.1} parent=1 // pred_check
      _
    $region43: #{actor_forward.1} parent=1 // pred_check_branch
      %40 = sbr.rel (0) target = $region45
    $region44: #{actor_forward.1} parent=1 // pred_region
      _
    $region45: #{actor_forward.1} parent=1 // pred_fallthru
      _
    // Predicated region
    $region46: #{actor_forward.1} parent=1 // pred_check
      _
    $region47: #{actor_forward.1} parent=1 // pred_check_branch
      %42 = sbr.rel (0) target = $region49
    $region48: #{actor_forward.1} parent=1 // pred_region
      _
    $region49: #{actor_forward.1} parent=1 // pred_fallthru
      _
    // Predicated region
    $region50: #{actor_forward.1} parent=1 // pred_check
      _
    $region51: #{actor_forward.1} parent=1 // pred_check_branch
      %44 = sbr.rel (0) target = $region53
    $region52: #{actor_forward.1} parent=1 // pred_region
      _
    $region53: #{actor_forward.1} parent=1 // pred_fallthru
      _
    %v46 = vld [vmem:[%s2] sm:$0x3]
    %v47 = vld [vmem:[%s0] sm:$0xff]
    %v48 = vld [vmem:[%s0 + $0x8] sm:$0xff]
    %v49 = vld [vmem:[%s0 + $0x10] sm:$0xff]
    %v50 = vld [vmem:[%s0 + $0x18] sm:$0xff]
    %v51 = vld [vmem:[%s0 + $0x20] sm:$0xff]
    %v52 = vld [vmem:[%s0 + $0x28] sm:$0xff]
    %v53 = vld [vmem:[%s0 + $0x30] sm:$0xff]
    %v54 = vld [vmem:[%s0 + $0x38] sm:$0xff]
    %v55 = vld [vmem:[%s0 + $0x40] sm:$0xff]
    %v56 = vld [vmem:[%s0 + $0x48] sm:$0xff]
    %v57 = vld [vmem:[%s0 + $0x50] sm:$0xff]
    %v58 = vld [vmem:[%s0 + $0x58] sm:$0xff]
    %v59 = vld [vmem:[%s0 + $0x60] sm:$0xff]
    %v60 = vld [vmem:[%s0 + $0x68] sm:$0xff]
    %v61 = vld [vmem:[%s0 + $0x70] sm:$0xff]
    %v62 = vld [vmem:[%s0 + $0x78] sm:$0xff]
    %v63 = vld [vmem:[%s0 + $0x80] sm:$0xff]
    %v64 = vld [vmem:[%s0 + $0x88] sm:$0xff]
    %v65 = vld [vmem:[%s0 + $0x90] sm:$0xff]
    %v66 = vld [vmem:[%s0 + $0x98] sm:$0xff]
    %v67 = vld [vmem:[%s0 + $0xa0] sm:$0xff]
    %v68 = vld [vmem:[%s0 + $0xa8] sm:$0xff]
    %v69 = vld [vmem:[%s0 + $0xb0] sm:$0xff]
    %v70 = vld [vmem:[%s0 + $0xb8] sm:$0xff]
    %v71 = vld [vmem:[%s0 + $0xc0] sm:$0xff]
    %v72 = vld [vmem:[%s0 + $0xc8] sm:$0xff]
    %v73 = vld [vmem:[%s0 + $0xd0] sm:$0xff]
    %v74 = vld [vmem:[%s0 + $0xd8] sm:$0xff]
    %v75 = vld [vmem:[%s0 + $0xe0] sm:$0xff]
    %v76 = vld [vmem:[%s0 + $0xe8] sm:$0xff]
    %v77 = vld [vmem:[%s0 + $0xf0] sm:$0xff]
    %v78 = vld [vmem:[%s0 + $0xf8] sm:$0xff]
    %v79 = vld [vmem:[%s0 + $0x100] sm:$0xff]
    %v80 = vld [vmem:[%s0 + $0x108] sm:$0xff]
    %v81 = vld [vmem:[%s0 + $0x110] sm:$0xff]
    %v82 = vld [vmem:[%s0 + $0x118] sm:$0xff]
    %v83 = vld [vmem:[%s0 + $0x120] sm:$0xff]
    %v84 = vld [vmem:[%s0 + $0x128] sm:$0xff]
    %v85 = vld [vmem:[%s0 + $0x130] sm:$0xff]
    %v86 = vld [vmem:[%s0 + $0x138] sm:$0xff]
    %v87 = vld [vmem:[%s0 + $0x140] sm:$0xff]
    %v88 = vld [vmem:[%s0 + $0x148] sm:$0xff]
    %v89 = vld [vmem:[%s0 + $0x150] sm:$0xff]
    %v90 = vld [vmem:[%s0 + $0x158] sm:$0xff]
    %v91 = vld [vmem:[%s0 + $0x160] sm:$0xff]
    %v92 = vld [vmem:[%s0 + $0x168] sm:$0xff]
    %v93 = vld [vmem:[%s0 + $0x170] sm:$0xff]
    %v94 = vld [vmem:[%s0 + $0x178] sm:$0xff]
    %v95 = vld [vmem:[%s0 + $0x180] sm:$0xff]
    %v96 = vld [vmem:[%s0 + $0x188] sm:$0xff]
    %v97 = vld [vmem:[%s0 + $0x190] sm:$0xff]
    %v98 = vld [vmem:[%s0 + $0x198] sm:$0xff]
    %v99 = vld [vmem:[%s0 + $0x1a0] sm:$0xff]
    %v100 = vld [vmem:[%s0 + $0x1a8] sm:$0xff]
    %v101 = vld [vmem:[%s0 + $0x1b0] sm:$0xff]
    %v102 = vld [vmem:[%s0 + $0x1b8] sm:$0xff]
    %v103 = vld [vmem:[%s0 + $0x1c0] sm:$0xff]
    %v104 = vld [vmem:[%s0 + $0x1c8] sm:$0xff]
    %v105 = vld [vmem:[%s0 + $0x1d0] sm:$0xff]
    %v106 = vld [vmem:[%s0 + $0x1d8] sm:$0xff]
    %v107 = vld [vmem:[%s0 + $0x1e0] sm:$0xff]
    %v108 = vld [vmem:[%s0 + $0x1e8] sm:$0xff]
    %v109 = vld [vmem:[%s0 + $0x1f0] sm:$0xff]
    %v110 = vld [vmem:[%s0 + $0x1f8] sm:$0xff]
    %v111 = vld [vmem:[%s0 + $0x200] sm:$0xff]
    %v112 = vld [vmem:[%s0 + $0x208] sm:$0xff]
    %v113 = vld [vmem:[%s0 + $0x210] sm:$0xff]
    %v114 = vld [vmem:[%s0 + $0x218] sm:$0xff]
    %v115 = vld [vmem:[%s0 + $0x220] sm:$0xff]
    %v116 = vld [vmem:[%s0 + $0x228] sm:$0xff]
    %v117 = vld [vmem:[%s0 + $0x230] sm:$0xff]
    %v118 = vld [vmem:[%s0 + $0x238] sm:$0xff]
    %v119 = vld [vmem:[%s3] sm:$0x3]
    %121 = vset.pattern.permute.xlu0 0
    %122 = vperm.xlu0 %121, %v119
    %v123 = vpop.permute.xlu0 %122
    %126 = vst [vmem:[#allocation1] ss:$9 sm:$0xff] %v46
    %v127 = vld [vmem:[#allocation1] sm:$0xff]
    %v128 = vld [vmem:[#allocation1 + $0x9] sm:$0xff]
    %v202 = vunpack.c.l.b16 %v47
    %v203 = vunpack.c.h.b16 %v47
    %v204 = vunpack.c.l.b16 %v48
    %v205 = vunpack.c.h.b16 %v48
    %v206 = vunpack.c.l.b16 %v49
    %v207 = vunpack.c.h.b16 %v49
    %v208 = vunpack.c.l.b16 %v50
    %v209 = vunpack.c.h.b16 %v50
    %v210 = vunpack.c.l.b16 %v51
    %v211 = vunpack.c.h.b16 %v51
    %v212 = vunpack.c.l.b16 %v52
    %v213 = vunpack.c.h.b16 %v52
    %v214 = vunpack.c.l.b16 %v53
    %v215 = vunpack.c.h.b16 %v53
    %v216 = vunpack.c.l.b16 %v54
    %v217 = vunpack.c.h.b16 %v54
    %v218 = vunpack.c.l.b16 %v55
    %v219 = vunpack.c.h.b16 %v55
    %v220 = vunpack.c.l.b16 %v56
    %v221 = vunpack.c.h.b16 %v56
    %v222 = vunpack.c.l.b16 %v57
    %v223 = vunpack.c.h.b16 %v57
    %v224 = vunpack.c.l.b16 %v58
    %v225 = vunpack.c.h.b16 %v58
    %v226 = vunpack.c.l.b16 %v59
    %v227 = vunpack.c.h.b16 %v59
    %v228 = vunpack.c.l.b16 %v60
    %v229 = vunpack.c.h.b16 %v60
    %v230 = vunpack.c.l.b16 %v61
    %v231 = vunpack.c.h.b16 %v61
    %v232 = vunpack.c.l.b16 %v62
    %v233 = vunpack.c.h.b16 %v62
    %v234 = vunpack.c.l.b16 %v63
    %v235 = vunpack.c.h.b16 %v63
    %v236 = vunpack.c.l.b16 %v64
    %v237 = vunpack.c.h.b16 %v64
    %v238 = vunpack.c.l.b16 %v65
    %v239 = vunpack.c.h.b16 %v65
    %v240 = vunpack.c.l.b16 %v66
    %v241 = vunpack.c.h.b16 %v66
    %v242 = vunpack.c.l.b16 %v67
    %v243 = vunpack.c.h.b16 %v67
    %v244 = vunpack.c.l.b16 %v68
    %v245 = vunpack.c.h.b16 %v68
    %v246 = vunpack.c.l.b16 %v69
    %v247 = vunpack.c.h.b16 %v69
    %v248 = vunpack.c.l.b16 %v70
    %v249 = vunpack.c.h.b16 %v70
    %v250 = vunpack.c.l.b16 %v71
    %v251 = vunpack.c.h.b16 %v71
    %v252 = vunpack.c.l.b16 %v72
    %v253 = vunpack.c.h.b16 %v72
    %v254 = vunpack.c.l.b16 %v73
    %v255 = vunpack.c.h.b16 %v73
    %v256 = vunpack.c.l.b16 %v74
    %v257 = vunpack.c.h.b16 %v74
    %v258 = vunpack.c.l.b16 %v75
    %v259 = vunpack.c.h.b16 %v75
    %v260 = vunpack.c.l.b16 %v76
    %v261 = vunpack.c.h.b16 %v76
    %v262 = vunpack.c.l.b16 %v77
    %v263 = vunpack.c.h.b16 %v77
    %v264 = vunpack.c.l.b16 %v78
    %v265 = vunpack.c.h.b16 %v78
    %v266 = vunpack.c.l.b16 %v79
    %v267 = vunpack.c.h.b16 %v79
    %v268 = vunpack.c.l.b16 %v80
    %v269 = vunpack.c.h.b16 %v80
    %v270 = vunpack.c.l.b16 %v81
    %v271 = vunpack.c.h.b16 %v81
    %v272 = vunpack.c.l.b16 %v82
    %v273 = vunpack.c.h.b16 %v82
    %v274 = vunpack.c.l.b16 %v83
    %v275 = vunpack.c.h.b16 %v83
    %v276 = vunpack.c.l.b16 %v84
    %v277 = vunpack.c.h.b16 %v84
    %v278 = vunpack.c.l.b16 %v85
    %v279 = vunpack.c.h.b16 %v85
    %v280 = vunpack.c.l.b16 %v86
    %v281 = vunpack.c.h.b16 %v86
    %v282 = vunpack.c.l.b16 %v87
    %v283 = vunpack.c.h.b16 %v87
    %v284 = vunpack.c.l.b16 %v88
    %v285 = vunpack.c.h.b16 %v88
    %v286 = vunpack.c.l.b16 %v89
    %v287 = vunpack.c.h.b16 %v89
    %v288 = vunpack.c.l.b16 %v90
    %v289 = vunpack.c.h.b16 %v90
    %v290 = vunpack.c.l.b16 %v91
    %v291 = vunpack.c.h.b16 %v91
    %v292 = vunpack.c.l.b16 %v92
    %v293 = vunpack.c.h.b16 %v92
    %v294 = vunpack.c.l.b16 %v93
    %v295 = vunpack.c.h.b16 %v93
    %v296 = vunpack.c.l.b16 %v94
    %v297 = vunpack.c.h.b16 %v94
    %v298 = vunpack.c.l.b16 %v95
    %v299 = vunpack.c.h.b16 %v95
    %v300 = vunpack.c.l.b16 %v96
    %v301 = vunpack.c.h.b16 %v96
    %v302 = vunpack.c.l.b16 %v97
    %v303 = vunpack.c.h.b16 %v97
    %v304 = vunpack.c.l.b16 %v98
    %v305 = vunpack.c.h.b16 %v98
    %v306 = vunpack.c.l.b16 %v99
    %v307 = vunpack.c.h.b16 %v99
    %v308 = vunpack.c.l.b16 %v100
    %v309 = vunpack.c.h.b16 %v100
    %v310 = vunpack.c.l.b16 %v101
    %v311 = vunpack.c.h.b16 %v101
    %v312 = vunpack.c.l.b16 %v102
    %v313 = vunpack.c.h.b16 %v102
    %v314 = vunpack.c.l.b16 %v103
    %v315 = vunpack.c.h.b16 %v103
    %v316 = vunpack.c.l.b16 %v104
    %v317 = vunpack.c.h.b16 %v104
    %v318 = vunpack.c.l.b16 %v105
    %v319 = vunpack.c.h.b16 %v105
    %v320 = vunpack.c.l.b16 %v106
    %v321 = vunpack.c.h.b16 %v106
    %v322 = vunpack.c.l.b16 %v107
    %v323 = vunpack.c.h.b16 %v107
    %v324 = vunpack.c.l.b16 %v108
    %v325 = vunpack.c.h.b16 %v108
    %v326 = vunpack.c.l.b16 %v109
    %v327 = vunpack.c.h.b16 %v109
    %v328 = vunpack.c.l.b16 %v110
    %v329 = vunpack.c.h.b16 %v110
    %v330 = vunpack.c.l.b16 %v111
    %v331 = vunpack.c.h.b16 %v111
    %v332 = vunpack.c.l.b16 %v112
    %v333 = vunpack.c.h.b16 %v112
    %v334 = vunpack.c.l.b16 %v113
    %v335 = vunpack.c.h.b16 %v113
    %v336 = vunpack.c.l.b16 %v114
    %v337 = vunpack.c.h.b16 %v114
    %v338 = vunpack.c.l.b16 %v115
    %v339 = vunpack.c.h.b16 %v115
    %v340 = vunpack.c.l.b16 %v116
    %v341 = vunpack.c.h.b16 %v116
    %v342 = vunpack.c.l.b16 %v117
    %v343 = vunpack.c.h.b16 %v117
    %v344 = vunpack.c.l.b16 %v118
    %v345 = vunpack.c.h.b16 %v118
    %v346 = vpack.c.b16 %v208, %v202
    %v347 = vpack.c.b16 %v209, %v203
    %v348 = vpack.c.b16 %v210, %v204
    %v349 = vpack.c.b16 %v211, %v205
    %v350 = vpack.c.b16 %v212, %v206
    %v351 = vpack.c.b16 %v213, %v207
    %v352 = vpack.c.b16 %v220, %v214
    %v353 = vpack.c.b16 %v221, %v215
    %v354 = vpack.c.b16 %v222, %v216
    %v355 = vpack.c.b16 %v223, %v217
    %v356 = vpack.c.b16 %v224, %v218
    %v357 = vpack.c.b16 %v225, %v219
    %v358 = vpack.c.b16 %v232, %v226
    %v359 = vpack.c.b16 %v233, %v227
    %v360 = vpack.c.b16 %v234, %v228
    %v361 = vpack.c.b16 %v235, %v229
    %v362 = vpack.c.b16 %v236, %v230
    %v363 = vpack.c.b16 %v237, %v231
    %v364 = vpack.c.b16 %v244, %v238
    %v365 = vpack.c.b16 %v245, %v239
    %v366 = vpack.c.b16 %v246, %v240
    %v367 = vpack.c.b16 %v247, %v241
    %v368 = vpack.c.b16 %v248, %v242
    %v369 = vpack.c.b16 %v249, %v243
    %v370 = vpack.c.b16 %v256, %v250
    %v371 = vpack.c.b16 %v257, %v251
    %v372 = vpack.c.b16 %v258, %v252
    %v373 = vpack.c.b16 %v259, %v253
    %v374 = vpack.c.b16 %v260, %v254
    %v375 = vpack.c.b16 %v261, %v255
    %v376 = vpack.c.b16 %v268, %v262
    %v377 = vpack.c.b16 %v269, %v263
    %v378 = vpack.c.b16 %v270, %v264
    %v379 = vpack.c.b16 %v271, %v265
    %v380 = vpack.c.b16 %v272, %v266
    %v381 = vpack.c.b16 %v273, %v267
    %v382 = vpack.c.b16 %v280, %v274
    %v383 = vpack.c.b16 %v281, %v275
    %v384 = vpack.c.b16 %v282, %v276
    %v385 = vpack.c.b16 %v283, %v277
    %v386 = vpack.c.b16 %v284, %v278
    %v387 = vpack.c.b16 %v285, %v279
    %v388 = vpack.c.b16 %v292, %v286
    %v389 = vpack.c.b16 %v293, %v287
    %v390 = vpack.c.b16 %v294, %v288
    %v391 = vpack.c.b16 %v295, %v289
    %v392 = vpack.c.b16 %v296, %v290
    %v393 = vpack.c.b16 %v297, %v291
    %v394 = vpack.c.b16 %v304, %v298
    %v395 = vpack.c.b16 %v305, %v299
    %v396 = vpack.c.b16 %v306, %v300
    %v397 = vpack.c.b16 %v307, %v301
    %v398 = vpack.c.b16 %v308, %v302
    %v399 = vpack.c.b16 %v309, %v303
    %v400 = vpack.c.b16 %v316, %v310
    %v401 = vpack.c.b16 %v317, %v311
    %v402 = vpack.c.b16 %v318, %v312
    %v403 = vpack.c.b16 %v319, %v313
    %v404 = vpack.c.b16 %v320, %v314
    %v405 = vpack.c.b16 %v321, %v315
    %v406 = vpack.c.b16 %v328, %v322
    %v407 = vpack.c.b16 %v329, %v323
    %v408 = vpack.c.b16 %v330, %v324
    %v409 = vpack.c.b16 %v331, %v325
    %v410 = vpack.c.b16 %v332, %v326
    %v411 = vpack.c.b16 %v333, %v327
    %v412 = vpack.c.b16 %v340, %v334
    %v413 = vpack.c.b16 %v341, %v335
    %v414 = vpack.c.b16 %v342, %v336
    %v415 = vpack.c.b16 %v343, %v337
    %v416 = vpack.c.b16 %v344, %v338
    %v417 = vpack.c.b16 %v345, %v339
    %vm490 = vcmask 523264
    %v491 = vsel %vm490, %v128, 0
    %493 = vmatpush.bf16.msra.mxu0 %v388
    %494 = vmatpush.bf16.msra.mxu0 %v382
    %495 = vmatpush.bf16.msra.mxu0 %v376
    %496 = vmatpush.bf16.msra.mxu0 %v370
    %497 = vmatpush.bf16.msra.mxu0 %v364
    %498 = vmatpush.bf16.msra.mxu0 %v358
    %499 = vmatpush.bf16.msra.mxu0 %v352
    %500 = vmatpush.bf16.msra.mxu0 %v346
    %501 = vmatmul.bf16.gmra.mxu0 %v127
    %v502 = vpop.f32.mrf.mxu0
    %v503 = vadd.f32 %v123, %v502
    %v504 = vpop.f32.mrf.mxu0
    %505 = vdwg.mxu0
    %506 = vmatpush.bf16.msra.mxu0 0
    %507 = vmatpush.bf16.msra.mxu0 0
    %508 = vmatpush.bf16.msra.mxu0 0
    %509 = vmatpush.bf16.msra.mxu0 0
    %510 = vmatpush.bf16.msra.mxu0 %v412
    %511 = vmatpush.bf16.msra.mxu0 %v406
    %512 = vmatpush.bf16.msra.mxu0 %v400
    %513 = vmatpush.bf16.msra.mxu0 %v394
    %514 = vmatmul.bf16.gmra.mxu0 %v491
    %v515 = vpop.f32.mrf.mxu0
    %v516 = vadd.f32 %v503, %v515
    %v517 = vpop.f32.mrf.mxu0
    %518 = vdwg.mxu0
    %519 = vmatpush.bf16.msra.mxu0 %v389
    %520 = vmatpush.bf16.msra.mxu0 %v383
    %521 = vmatpush.bf16.msra.mxu0 %v377
    %522 = vmatpush.bf16.msra.mxu0 %v371
    %523 = vmatpush.bf16.msra.mxu0 %v365
    %524 = vmatpush.bf16.msra.mxu0 %v359
    %525 = vmatpush.bf16.msra.mxu0 %v353
    %526 = vmatpush.bf16.msra.mxu0 %v347
    %527 = vmatmul.bf16.gmra.mxu0 %v127
    %v528 = vpop.f32.mrf.mxu0
    %v529 = vadd.f32 %v123, %v528
    %v530 = vpop.f32.mrf.mxu0
    %531 = vdwg.mxu0
    %532 = vmatpush.bf16.msra.mxu0 0
    %533 = vmatpush.bf16.msra.mxu0 0
    %534 = vmatpush.bf16.msra.mxu0 0
    %535 = vmatpush.bf16.msra.mxu0 0
    %536 = vmatpush.bf16.msra.mxu0 %v413
    %537 = vmatpush.bf16.msra.mxu0 %v407
    %538 = vmatpush.bf16.msra.mxu0 %v401
    %539 = vmatpush.bf16.msra.mxu0 %v395
    %540 = vmatmul.bf16.gmra.mxu0 %v491
    %v541 = vpop.f32.mrf.mxu0
    %v542 = vadd.f32 %v529, %v541
    %v543 = vpop.f32.mrf.mxu0
    %544 = vdwg.mxu0
    %545 = vmatpush.bf16.msra.mxu0 %v390
    %546 = vmatpush.bf16.msra.mxu0 %v384
    %547 = vmatpush.bf16.msra.mxu0 %v378
    %548 = vmatpush.bf16.msra.mxu0 %v372
    %549 = vmatpush.bf16.msra.mxu0 %v366
    %550 = vmatpush.bf16.msra.mxu0 %v360
    %551 = vmatpush.bf16.msra.mxu0 %v354
    %552 = vmatpush.bf16.msra.mxu0 %v348
    %553 = vmatmul.bf16.gmra.mxu0 %v127
    %v554 = vpop.f32.mrf.mxu0
    %v555 = vadd.f32 %v123, %v554
    %v556 = vpop.f32.mrf.mxu0
    %557 = vdwg.mxu0
    %558 = vmatpush.bf16.msra.mxu0 0
    %559 = vmatpush.bf16.msra.mxu0 0
    %560 = vmatpush.bf16.msra.mxu0 0
    %561 = vmatpush.bf16.msra.mxu0 0
    %562 = vmatpush.bf16.msra.mxu0 %v414
    %563 = vmatpush.bf16.msra.mxu0 %v408
    %564 = vmatpush.bf16.msra.mxu0 %v402
    %565 = vmatpush.bf16.msra.mxu0 %v396
    %566 = vmatmul.bf16.gmra.mxu0 %v491
    %v567 = vpop.f32.mrf.mxu0
    %v568 = vadd.f32 %v555, %v567
    %v569 = vpop.f32.mrf.mxu0
    %570 = vdwg.mxu0
    %571 = vmatpush.bf16.msra.mxu0 %v391
    %572 = vmatpush.bf16.msra.mxu0 %v385
    %573 = vmatpush.bf16.msra.mxu0 %v379
    %574 = vmatpush.bf16.msra.mxu0 %v373
    %575 = vmatpush.bf16.msra.mxu0 %v367
    %576 = vmatpush.bf16.msra.mxu0 %v361
    %577 = vmatpush.bf16.msra.mxu0 %v355
    %578 = vmatpush.bf16.msra.mxu0 %v349
    %579 = vmatmul.bf16.gmra.mxu0 %v127
    %v580 = vpop.f32.mrf.mxu0
    %v581 = vadd.f32 %v123, %v580
    %v582 = vpop.f32.mrf.mxu0
    %583 = vdwg.mxu0
    %584 = vmatpush.bf16.msra.mxu0 0
    %585 = vmatpush.bf16.msra.mxu0 0
    %586 = vmatpush.bf16.msra.mxu0 0
    %587 = vmatpush.bf16.msra.mxu0 0
    %588 = vmatpush.bf16.msra.mxu0 %v415
    %589 = vmatpush.bf16.msra.mxu0 %v409
    %590 = vmatpush.bf16.msra.mxu0 %v403
    %591 = vmatpush.bf16.msra.mxu0 %v397
    %592 = vmatmul.bf16.gmra.mxu0 %v491
    %v593 = vpop.f32.mrf.mxu0
    %v594 = vadd.f32 %v581, %v593
    %v595 = vpop.f32.mrf.mxu0
    %596 = vdwg.mxu0
    %597 = vmatpush.bf16.msra.mxu0 %v392
    %598 = vmatpush.bf16.msra.mxu0 %v386
    %599 = vmatpush.bf16.msra.mxu0 %v380
    %600 = vmatpush.bf16.msra.mxu0 %v374
    %601 = vmatpush.bf16.msra.mxu0 %v368
    %602 = vmatpush.bf16.msra.mxu0 %v362
    %603 = vmatpush.bf16.msra.mxu0 %v356
    %604 = vmatpush.bf16.msra.mxu0 %v350
    %605 = vmatmul.bf16.gmra.mxu0 %v127
    %v606 = vpop.f32.mrf.mxu0
    %v607 = vadd.f32 %v123, %v606
    %v608 = vpop.f32.mrf.mxu0
    %609 = vdwg.mxu0
    %610 = vmatpush.bf16.msra.mxu0 0
    %611 = vmatpush.bf16.msra.mxu0 0
    %612 = vmatpush.bf16.msra.mxu0 0
    %613 = vmatpush.bf16.msra.mxu0 0
    %614 = vmatpush.bf16.msra.mxu0 %v416
    %615 = vmatpush.bf16.msra.mxu0 %v410
    %616 = vmatpush.bf16.msra.mxu0 %v404
    %617 = vmatpush.bf16.msra.mxu0 %v398
    %618 = vmatmul.bf16.gmra.mxu0 %v491
    %v619 = vpop.f32.mrf.mxu0
    %v620 = vadd.f32 %v607, %v619
    %v621 = vpop.f32.mrf.mxu0
    %622 = vdwg.mxu0
    %623 = vmatpush.bf16.msra.mxu0 %v393
    %624 = vmatpush.bf16.msra.mxu0 %v387
    %625 = vmatpush.bf16.msra.mxu0 %v381
    %626 = vmatpush.bf16.msra.mxu0 %v375
    %627 = vmatpush.bf16.msra.mxu0 %v369
    %628 = vmatpush.bf16.msra.mxu0 %v363
    %629 = vmatpush.bf16.msra.mxu0 %v357
    %630 = vmatpush.bf16.msra.mxu0 %v351
    %631 = vmatmul.bf16.gmra.mxu0 %v127
    %v632 = vpop.f32.mrf.mxu0
    %v633 = vadd.f32 %v123, %v632
    %v634 = vpop.f32.mrf.mxu0
    %635 = vdwg.mxu0
    %636 = vmatpush.bf16.msra.mxu0 0
    %637 = vmatpush.bf16.msra.mxu0 0
    %638 = vmatpush.bf16.msra.mxu0 0
    %639 = vmatpush.bf16.msra.mxu0 0
    %640 = vmatpush.bf16.msra.mxu0 %v417
    %641 = vmatpush.bf16.msra.mxu0 %v411
    %642 = vmatpush.bf16.msra.mxu0 %v405
    %643 = vmatpush.bf16.msra.mxu0 %v399
    %644 = vmatmul.bf16.gmra.mxu0 %v491
    %v645 = vpop.f32.mrf.mxu0
    %v646 = vadd.f32 %v633, %v645
    %v647 = vpop.f32.mrf.mxu0
    %648 = vdwg.mxu0
    %v649 = vmax.f32 %v516, 0.0
    %v650 = vmax.f32 %v542, 0.0
    %v651 = vmax.f32 %v568, 0.0
    %v652 = vmax.f32 %v594, 0.0
    %v653 = vmax.f32 %v620, 0.0
    %v654 = vmax.f32 %v646, 0.0
    %v658 = vrot.slane %v650, 7
    %v659 = vrot.slane %v651, 6
    %vm660 = vcmask 1040384
    %v661 = vsel %vm660, %v649, %v658
    %vm662 = vcmask 1041408
    %v663 = vsel %vm662, %v661, %v659
    %v665 = vlaneseq
    %vm666 = vcmp.ge.s32.totalorder %v665, 0
    %vm667 = vcmp.lt.s32.totalorder %v665, 324
    %vm668 = vmand %vm666, %vm667
    %669 = vst.msk [vmem:[#allocation2] ss:$2 sm:$0x7] %vm668, %v663
    %670 = vst [vmem:[#allocation1] sm:$0xff] %v649
    %671 = vst [vmem:[#allocation1 + $0x9] sm:$0xff] %v650
    %672 = vst [vmem:[#allocation1 + $0x12] sm:$0xff] %v651
    %s673 = scalar_lea.vmem [#allocation1], 1
    %v674 = vld [vmem:[%s673] ss:$9 sm:$0xff]
    %675 = vrot.lane.b32.xlu0 %v674, 68
    %v676 = vpop.permute.xlu0 %675
    %v677 = vrot.slane %v676, 7
    %vm678 = vcmask 556032
    %v679 = vsel %vm678, %v677, %v676
    %vm681 = vcmp.ge.s32.totalorder %v665, 68
    %vm682 = vcmp.lt.s32.totalorder %v665, 392
    %vm683 = vmand %vm681, %vm682
    %s684 = scalar_lea.vmem [#allocation2], 4
    %685 = vst.msk [vmem:[%s684] ss:$2 sm:$0xf] %vm683, %v679
    %v689 = vrot.slane %v652, 7
    %v690 = vrot.slane %v653, 6
    %v691 = vrot.slane %v654, 5
    %v692 = vsel %vm660, %v651, %v689
    %vm693 = vcmask 1042434
    %v694 = vsel %vm693, %v690, %v691
    %v695 = vsel %vm662, %v692, %v694
    %696 = vrot.lane.b32.xlu0 %v695, 60
    %v697 = vpop.permute.xlu0 %696
    %v698 = vrot.slane %v697, 1
    %vm699 = vcmask 490496
    %v700 = vsel %vm699, %v697, %v698
    %s702 = scalar_lea.vmem [#allocation2], 1
    %703 = vst.msk [vmem:[%s702] ss:$2 sm:$0x7] %vm668, %v700
    %704 = vst [vmem:[#allocation1] sm:$0xff] %v651
    %705 = vst [vmem:[#allocation1 + $0x9] sm:$0xff] %v652
    %706 = vst [vmem:[#allocation1 + $0x12] sm:$0xff] %v653
    %707 = vst [vmem:[#allocation1 + $0x1b] sm:$0xff] %v654
    %s708 = scalar_lea.vmem [#allocation1], 1
    %v709 = vld [vmem:[%s708] ss:$9 sm:$0xff]
    %s711 = scalar_lea.vmem [#allocation2], 5
    %712 = vst.msk [vmem:[%s711] ss:$2 sm:$0xf] %vm683, %v709
    %v713 = vld [vmem:[#allocation2] sm:$0xff]
    %v714 = vld [vmem:[#allocation2 + $0x8] sm:$0xf]
    %717 = vst [vmem:[#allocation1] ss:$4 sm:$0xff] %v713
    %s718 = scalar_lea.vmem [#allocation1], 32
    %719 = vst [vmem:[%s718] ss:$4 sm:$0xff] %v714
    %v720 = vld.sshfl [vmem:[#allocation1] sm:$0xff pattern:$0x73625140]
    %v721 = vld.sshfl [vmem:[#allocation1 + $0x8] sm:$0xff pattern:$0x73625140]
    %v722 = vld.sshfl [vmem:[#allocation1 + $0x10] sm:$0xff pattern:$0x73625140]
    %v723 = vld.sshfl [vmem:[#allocation1 + $0x18] sm:$0xff pattern:$0x73625140]
    %v724 = vld.sshfl [vmem:[#allocation1 + $0x20] sm:$0xff pattern:$0x73625140]
    %v725 = vld.sshfl [vmem:[#allocation1 + $0x28] sm:$0xff pattern:$0x73625140]
    %v732 = vpack.c.bf16 %v720, %v720
    %v733 = vpack.c.bf16 %v721, %v721
    %v734 = vpack.c.bf16 %v722, %v722
    %v735 = vpack.c.bf16 %v723, %v723
    %v736 = vpack.c.bf16 %v724, %v724
    %v737 = vpack.c.bf16 %v725, %v725
    %v738 = vld [vmem:[%s4] sm:$0xff]
    %v739 = vld [vmem:[%s4 + $0x8] sm:$0xff]
    %v740 = vld [vmem:[%s4 + $0x10] sm:$0xff]
    %v741 = vld [vmem:[%s4 + $0x18] sm:$0xff]
    %v742 = vld [vmem:[%s4 + $0x20] sm:$0xff]
    %v743 = vld [vmem:[%s4 + $0x28] sm:$0xff]
    %v744 = vld [vmem:[%s4 + $0x30] sm:$0xff]
    %v745 = vld [vmem:[%s4 + $0x38] sm:$0xff]
    %v746 = vld [vmem:[%s4 + $0x40] sm:$0xff]
    %v747 = vld [vmem:[%s4 + $0x48] sm:$0xff]
    %v748 = vld [vmem:[%s4 + $0x50] sm:$0xff]
    %v749 = vld [vmem:[%s4 + $0x58] sm:$0xff]
    %v750 = vld [vmem:[%s4 + $0x60] sm:$0xff]
    %v751 = vld [vmem:[%s4 + $0x68] sm:$0xff]
    %v752 = vld [vmem:[%s4 + $0x70] sm:$0xff]
    %v753 = vld [vmem:[%s4 + $0x78] sm:$0xff]
    %v754 = vld [vmem:[%s4 + $0x80] sm:$0xff]
    %v755 = vld [vmem:[%s4 + $0x88] sm:$0xff]
    %v756 = vld [vmem:[%s4 + $0x90] sm:$0xff]
    %v757 = vld [vmem:[%s4 + $0x98] sm:$0xff]
    %v758 = vld [vmem:[%s4 + $0xa0] sm:$0xff]
    %v759 = vld [vmem:[%s4 + $0xa8] sm:$0xff]
    %v760 = vld [vmem:[%s4 + $0xb0] sm:$0xff]
    %v761 = vld [vmem:[%s4 + $0xb8] sm:$0xff]
    %v762 = vld [vmem:[%s4 + $0xc0] sm:$0xff]
    %v763 = vld [vmem:[%s4 + $0xc8] sm:$0xff]
    %v764 = vld [vmem:[%s4 + $0xd0] sm:$0xff]
    %v765 = vld [vmem:[%s4 + $0xd8] sm:$0xff]
    %v766 = vld [vmem:[%s4 + $0xe0] sm:$0xff]
    %v767 = vld [vmem:[%s4 + $0xe8] sm:$0xff]
    %v768 = vld [vmem:[%s4 + $0xf0] sm:$0xff]
    %v769 = vld [vmem:[%s4 + $0xf8] sm:$0xff]
    %v770 = vld [vmem:[%s4 + $0x100] sm:$0xff]
    %v771 = vld [vmem:[%s4 + $0x108] sm:$0xff]
    %v772 = vld [vmem:[%s4 + $0x110] sm:$0xff]
    %v773 = vld [vmem:[%s4 + $0x118] sm:$0xff]
    %v774 = vld [vmem:[%s4 + $0x120] sm:$0xff]
    %v775 = vld [vmem:[%s4 + $0x128] sm:$0xff]
    %v776 = vld [vmem:[%s4 + $0x130] sm:$0xff]
    %v777 = vld [vmem:[%s4 + $0x138] sm:$0xff]
    %v778 = vld [vmem:[%s4 + $0x140] sm:$0xff]
    %v779 = vld [vmem:[%s4 + $0x148] sm:$0xff]
    %v780 = vld [vmem:[%s4 + $0x150] sm:$0xff]
    %v781 = vld [vmem:[%s4 + $0x158] sm:$0xff]
    %v782 = vld [vmem:[%s4 + $0x160] sm:$0xff]
    %v783 = vld [vmem:[%s4 + $0x168] sm:$0xff]
    %v784 = vld [vmem:[%s4 + $0x170] sm:$0xff]
    %v785 = vld [vmem:[%s4 + $0x178] sm:$0xff]
    %v786 = vld [vmem:[%s4 + $0x180] sm:$0xff]
    %v787 = vld [vmem:[%s4 + $0x188] sm:$0xff]
    %v788 = vld [vmem:[%s4 + $0x190] sm:$0xff]
    %v789 = vld [vmem:[%s4 + $0x198] sm:$0xff]
    %v790 = vld [vmem:[%s4 + $0x1a0] sm:$0xff]
    %v791 = vld [vmem:[%s4 + $0x1a8] sm:$0xff]
    %v792 = vld [vmem:[%s4 + $0x1b0] sm:$0xff]
    %v793 = vld [vmem:[%s4 + $0x1b8] sm:$0xff]
    %v794 = vld [vmem:[%s4 + $0x1c0] sm:$0xff]
    %v795 = vld [vmem:[%s4 + $0x1c8] sm:$0xff]
    %v796 = vld [vmem:[%s4 + $0x1d0] sm:$0xff]
    %v797 = vld [vmem:[%s4 + $0x1d8] sm:$0xff]
    %v798 = vld [vmem:[%s4 + $0x1e0] sm:$0xff]
    %v799 = vld [vmem:[%s4 + $0x1e8] sm:$0xff]
    %v800 = vld [vmem:[%s4 + $0x1f0] sm:$0xff]
    %v801 = vld [vmem:[%s4 + $0x1f8] sm:$0xff]
    %v802 = vld [vmem:[%s4 + $0x200] sm:$0xff]
    %v803 = vld [vmem:[%s4 + $0x208] sm:$0xff]
    %v804 = vld [vmem:[%s4 + $0x210] sm:$0xff]
    %v805 = vld [vmem:[%s4 + $0x218] sm:$0xff]
    %v806 = vld [vmem:[%s4 + $0x220] sm:$0xff]
    %v807 = vld [vmem:[%s4 + $0x228] sm:$0xff]
    %v808 = vld [vmem:[%s4 + $0x230] sm:$0xff]
    %v809 = vld [vmem:[%s4 + $0x238] sm:$0xff]
    %v810 = vld [vmem:[%s4 + $0x240] sm:$0xff]
    %v811 = vld [vmem:[%s4 + $0x248] sm:$0xff]
    %v812 = vld [vmem:[%s4 + $0x250] sm:$0xff]
    %v813 = vld [vmem:[%s4 + $0x258] sm:$0xff]
    %v814 = vld [vmem:[%s4 + $0x260] sm:$0xff]
    %v815 = vld [vmem:[%s4 + $0x268] sm:$0xff]
    %v816 = vld [vmem:[%s4 + $0x270] sm:$0xff]
    %v817 = vld [vmem:[%s4 + $0x278] sm:$0xff]
    %v818 = vld [vmem:[%s4 + $0x280] sm:$0xff]
    %v819 = vld [vmem:[%s5] sm:$0x3]
    %v821 = vperm.slane %v819, 0
    %v822 = vperm.slane %v819, 1
    %v906 = vunpack.c.l.b16 %v738
    %v907 = vunpack.c.h.b16 %v738
    %v908 = vunpack.c.l.b16 %v739
    %v909 = vunpack.c.h.b16 %v739
    %v910 = vunpack.c.l.b16 %v740
    %v911 = vunpack.c.h.b16 %v740
    %v912 = vunpack.c.l.b16 %v741
    %v913 = vunpack.c.h.b16 %v741
    %v914 = vunpack.c.l.b16 %v742
    %v915 = vunpack.c.h.b16 %v742
    %v916 = vunpack.c.l.b16 %v743
    %v917 = vunpack.c.h.b16 %v743
    %v918 = vunpack.c.l.b16 %v744
    %v919 = vunpack.c.h.b16 %v744
    %v920 = vunpack.c.l.b16 %v745
    %v921 = vunpack.c.h.b16 %v745
    %v922 = vunpack.c.l.b16 %v746
    %v923 = vunpack.c.h.b16 %v746
    %v924 = vunpack.c.l.b16 %v747
    %v925 = vunpack.c.h.b16 %v747
    %v926 = vunpack.c.l.b16 %v748
    %v927 = vunpack.c.h.b16 %v748
    %v928 = vunpack.c.l.b16 %v749
    %v929 = vunpack.c.h.b16 %v749
    %v930 = vunpack.c.l.b16 %v750
    %v931 = vunpack.c.h.b16 %v750
    %v932 = vunpack.c.l.b16 %v751
    %v933 = vunpack.c.h.b16 %v751
    %v934 = vunpack.c.l.b16 %v752
    %v935 = vunpack.c.h.b16 %v752
    %v936 = vunpack.c.l.b16 %v753
    %v937 = vunpack.c.h.b16 %v753
    %v938 = vunpack.c.l.b16 %v754
    %v939 = vunpack.c.h.b16 %v754
    %v940 = vunpack.c.l.b16 %v755
    %v941 = vunpack.c.h.b16 %v755
    %v942 = vunpack.c.l.b16 %v756
    %v943 = vunpack.c.h.b16 %v756
    %v944 = vunpack.c.l.b16 %v757
    %v945 = vunpack.c.h.b16 %v757
    %v946 = vunpack.c.l.b16 %v758
    %v947 = vunpack.c.h.b16 %v758
    %v948 = vunpack.c.l.b16 %v759
    %v949 = vunpack.c.h.b16 %v759
    %v950 = vunpack.c.l.b16 %v760
    %v951 = vunpack.c.h.b16 %v760
    %v952 = vunpack.c.l.b16 %v761
    %v953 = vunpack.c.h.b16 %v761
    %v954 = vunpack.c.l.b16 %v762
    %v955 = vunpack.c.h.b16 %v762
    %v956 = vunpack.c.l.b16 %v763
    %v957 = vunpack.c.h.b16 %v763
    %v958 = vunpack.c.l.b16 %v764
    %v959 = vunpack.c.h.b16 %v764
    %v960 = vunpack.c.l.b16 %v765
    %v961 = vunpack.c.h.b16 %v765
    %v962 = vunpack.c.l.b16 %v766
    %v963 = vunpack.c.h.b16 %v766
    %v964 = vunpack.c.l.b16 %v767
    %v965 = vunpack.c.h.b16 %v767
    %v966 = vunpack.c.l.b16 %v768
    %v967 = vunpack.c.h.b16 %v768
    %v968 = vunpack.c.l.b16 %v769
    %v969 = vunpack.c.h.b16 %v769
    %v970 = vunpack.c.l.b16 %v770
    %v971 = vunpack.c.h.b16 %v770
    %v972 = vunpack.c.l.b16 %v771
    %v973 = vunpack.c.h.b16 %v771
    %v974 = vunpack.c.l.b16 %v772
    %v975 = vunpack.c.h.b16 %v772
    %v976 = vunpack.c.l.b16 %v773
    %v977 = vunpack.c.h.b16 %v773
    %v978 = vunpack.c.l.b16 %v774
    %v979 = vunpack.c.h.b16 %v774
    %v980 = vunpack.c.l.b16 %v775
    %v981 = vunpack.c.h.b16 %v775
    %v982 = vunpack.c.l.b16 %v776
    %v983 = vunpack.c.h.b16 %v776
    %v984 = vunpack.c.l.b16 %v777
    %v985 = vunpack.c.h.b16 %v777
    %v986 = vunpack.c.l.b16 %v778
    %v987 = vunpack.c.h.b16 %v778
    %v988 = vunpack.c.l.b16 %v779
    %v989 = vunpack.c.h.b16 %v779
    %v990 = vunpack.c.l.b16 %v780
    %v991 = vunpack.c.h.b16 %v780
    %v992 = vunpack.c.l.b16 %v781
    %v993 = vunpack.c.h.b16 %v781
    %v994 = vunpack.c.l.b16 %v782
    %v995 = vunpack.c.h.b16 %v782
    %v996 = vunpack.c.l.b16 %v783
    %v997 = vunpack.c.h.b16 %v783
    %v998 = vunpack.c.l.b16 %v784
    %v999 = vunpack.c.h.b16 %v784
    %v1000 = vunpack.c.l.b16 %v785
    %v1001 = vunpack.c.h.b16 %v785
    %v1002 = vunpack.c.l.b16 %v786
    %v1003 = vunpack.c.h.b16 %v786
    %v1004 = vunpack.c.l.b16 %v787
    %v1005 = vunpack.c.h.b16 %v787
    %v1006 = vunpack.c.l.b16 %v788
    %v1007 = vunpack.c.h.b16 %v788
    %v1008 = vunpack.c.l.b16 %v789
    %v1009 = vunpack.c.h.b16 %v789
    %v1010 = vunpack.c.l.b16 %v790
    %v1011 = vunpack.c.h.b16 %v790
    %v1012 = vunpack.c.l.b16 %v791
    %v1013 = vunpack.c.h.b16 %v791
    %v1014 = vunpack.c.l.b16 %v792
    %v1015 = vunpack.c.h.b16 %v792
    %v1016 = vunpack.c.l.b16 %v793
    %v1017 = vunpack.c.h.b16 %v793
    %v1018 = vunpack.c.l.b16 %v794
    %v1019 = vunpack.c.h.b16 %v794
    %v1020 = vunpack.c.l.b16 %v795
    %v1021 = vunpack.c.h.b16 %v795
    %v1022 = vunpack.c.l.b16 %v796
    %v1023 = vunpack.c.h.b16 %v796
    %v1024 = vunpack.c.l.b16 %v797
    %v1025 = vunpack.c.h.b16 %v797
    %v1026 = vunpack.c.l.b16 %v798
    %v1027 = vunpack.c.h.b16 %v798
    %v1028 = vunpack.c.l.b16 %v799
    %v1029 = vunpack.c.h.b16 %v799
    %v1030 = vunpack.c.l.b16 %v800
    %v1031 = vunpack.c.h.b16 %v800
    %v1032 = vunpack.c.l.b16 %v801
    %v1033 = vunpack.c.h.b16 %v801
    %v1034 = vunpack.c.l.b16 %v802
    %v1035 = vunpack.c.h.b16 %v802
    %v1036 = vunpack.c.l.b16 %v803
    %v1037 = vunpack.c.h.b16 %v803
    %v1038 = vunpack.c.l.b16 %v804
    %v1039 = vunpack.c.h.b16 %v804
    %v1040 = vunpack.c.l.b16 %v805
    %v1041 = vunpack.c.h.b16 %v805
    %v1042 = vunpack.c.l.b16 %v806
    %v1043 = vunpack.c.h.b16 %v806
    %v1044 = vunpack.c.l.b16 %v807
    %v1045 = vunpack.c.h.b16 %v807
    %v1046 = vunpack.c.l.b16 %v808
    %v1047 = vunpack.c.h.b16 %v808
    %v1048 = vunpack.c.l.b16 %v809
    %v1049 = vunpack.c.h.b16 %v809
    %v1050 = vunpack.c.l.b16 %v810
    %v1051 = vunpack.c.h.b16 %v810
    %v1052 = vunpack.c.l.b16 %v811
    %v1053 = vunpack.c.h.b16 %v811
    %v1054 = vunpack.c.l.b16 %v812
    %v1055 = vunpack.c.h.b16 %v812
    %v1056 = vunpack.c.l.b16 %v813
    %v1057 = vunpack.c.h.b16 %v813
    %v1058 = vunpack.c.l.b16 %v814
    %v1059 = vunpack.c.h.b16 %v814
    %v1060 = vunpack.c.l.b16 %v815
    %v1061 = vunpack.c.h.b16 %v815
    %v1062 = vunpack.c.l.b16 %v816
    %v1063 = vunpack.c.h.b16 %v816
    %v1064 = vunpack.c.l.b16 %v817
    %v1065 = vunpack.c.h.b16 %v817
    %v1066 = vunpack.c.l.b16 %v818
    %v1067 = vunpack.c.h.b16 %v818
    %v1068 = vpack.c.b16 %v908, %v906
    %v1069 = vpack.c.b16 %v909, %v907
    %v1070 = vpack.c.b16 %v912, %v910
    %v1071 = vpack.c.b16 %v913, %v911
    %v1072 = vpack.c.b16 %v916, %v914
    %v1073 = vpack.c.b16 %v917, %v915
    %v1074 = vpack.c.b16 %v920, %v918
    %v1075 = vpack.c.b16 %v921, %v919
    %v1076 = vpack.c.b16 %v924, %v922
    %v1077 = vpack.c.b16 %v925, %v923
    %v1078 = vpack.c.b16 %v928, %v926
    %v1079 = vpack.c.b16 %v929, %v927
    %v1080 = vpack.c.b16 %v932, %v930
    %v1081 = vpack.c.b16 %v933, %v931
    %v1082 = vpack.c.b16 %v936, %v934
    %v1083 = vpack.c.b16 %v937, %v935
    %v1084 = vpack.c.b16 %v940, %v938
    %v1085 = vpack.c.b16 %v941, %v939
    %v1086 = vpack.c.b16 %v944, %v942
    %v1087 = vpack.c.b16 %v945, %v943
    %v1088 = vpack.c.b16 %v948, %v946
    %v1089 = vpack.c.b16 %v949, %v947
    %v1090 = vpack.c.b16 %v952, %v950
    %v1091 = vpack.c.b16 %v953, %v951
    %v1092 = vpack.c.b16 %v956, %v954
    %v1093 = vpack.c.b16 %v957, %v955
    %v1094 = vpack.c.b16 %v960, %v958
    %v1095 = vpack.c.b16 %v961, %v959
    %v1096 = vpack.c.b16 %v964, %v962
    %v1097 = vpack.c.b16 %v965, %v963
    %v1098 = vpack.c.b16 %v968, %v966
    %v1099 = vpack.c.b16 %v969, %v967
    %v1100 = vpack.c.b16 %v972, %v970
    %v1101 = vpack.c.b16 %v973, %v971
    %v1102 = vpack.c.b16 %v976, %v974
    %v1103 = vpack.c.b16 %v977, %v975
    %v1104 = vpack.c.b16 %v980, %v978
    %v1105 = vpack.c.b16 %v981, %v979
    %v1106 = vpack.c.b16 %v984, %v982
    %v1107 = vpack.c.b16 %v985, %v983
    %v1108 = vpack.c.b16 %v988, %v986
    %v1109 = vpack.c.b16 %v989, %v987
    %v1110 = vpack.c.b16 %v992, %v990
    %v1111 = vpack.c.b16 %v993, %v991
    %v1112 = vpack.c.b16 %v996, %v994
    %v1113 = vpack.c.b16 %v997, %v995
    %v1114 = vpack.c.b16 %v1000, %v998
    %v1115 = vpack.c.b16 %v1001, %v999
    %v1116 = vpack.c.b16 %v1004, %v1002
    %v1117 = vpack.c.b16 %v1005, %v1003
    %v1118 = vpack.c.b16 %v1008, %v1006
    %v1119 = vpack.c.b16 %v1009, %v1007
    %v1120 = vpack.c.b16 %v1012, %v1010
    %v1121 = vpack.c.b16 %v1013, %v1011
    %v1122 = vpack.c.b16 %v1016, %v1014
    %v1123 = vpack.c.b16 %v1017, %v1015
    %v1124 = vpack.c.b16 %v1020, %v1018
    %v1125 = vpack.c.b16 %v1021, %v1019
    %v1126 = vpack.c.b16 %v1024, %v1022
    %v1127 = vpack.c.b16 %v1025, %v1023
    %v1128 = vpack.c.b16 %v1028, %v1026
    %v1129 = vpack.c.b16 %v1029, %v1027
    %v1130 = vpack.c.b16 %v1032, %v1030
    %v1131 = vpack.c.b16 %v1033, %v1031
    %v1132 = vpack.c.b16 %v1036, %v1034
    %v1133 = vpack.c.b16 %v1037, %v1035
    %v1134 = vpack.c.b16 %v1040, %v1038
    %v1135 = vpack.c.b16 %v1041, %v1039
    %v1136 = vpack.c.b16 %v1044, %v1042
    %v1137 = vpack.c.b16 %v1045, %v1043
    %v1138 = vpack.c.b16 %v1048, %v1046
    %v1139 = vpack.c.b16 %v1049, %v1047
    %v1140 = vpack.c.b16 %v1052, %v1050
    %v1141 = vpack.c.b16 %v1053, %v1051
    %v1142 = vpack.c.b16 %v1056, %v1054
    %v1143 = vpack.c.b16 %v1057, %v1055
    %v1144 = vpack.c.b16 %v1060, %v1058
    %v1145 = vpack.c.b16 %v1061, %v1059
    %v1146 = vpack.c.b16 %v1064, %v1062
    %v1147 = vpack.c.b16 %v1065, %v1063
    %v1148 = vpack.c.b16 %v1066, %v1066
    %v1149 = vpack.c.b16 %v1067, %v1067
    %vm1230 = vcmask 64512
    %v1232 = vsel %vm1230, %v737, 0
    %vm1234 = vcmask 1043456
    %v1236 = vsel %vm1234, %v1148, 0
    %v1239 = vsel %vm1234, %v1149, 0
    %1241 = vmatpush.bf16.msra.mxu0 %v1082
    %1242 = vmatpush.bf16.msra.mxu0 %v1080
    %1243 = vmatpush.bf16.msra.mxu0 %v1078
    %1244 = vmatpush.bf16.msra.mxu0 %v1076
    %1245 = vmatpush.bf16.msra.mxu0 %v1074
    %1246 = vmatpush.bf16.msra.mxu0 %v1072
    %1247 = vmatpush.bf16.msra.mxu0 %v1070
    %1248 = vmatpush.bf16.msra.mxu0 %v1068
    %1249 = vmatmul.bf16.gmra.mxu0 %v732
    %v1250 = vpop.f32.mrf.mxu0
    %v1251 = vadd.f32 %v821, %v1250
    %v1252 = vpop.f32.mrf.mxu0
    %1253 = vdwg.mxu0
    %1254 = vmatpush.bf16.msra.mxu0 %v1098
    %1255 = vmatpush.bf16.msra.mxu0 %v1096
    %1256 = vmatpush.bf16.msra.mxu0 %v1094
    %1257 = vmatpush.bf16.msra.mxu0 %v1092
    %1258 = vmatpush.bf16.msra.mxu0 %v1090
    %1259 = vmatpush.bf16.msra.mxu0 %v1088
    %1260 = vmatpush.bf16.msra.mxu0 %v1086
    %1261 = vmatpush.bf16.msra.mxu0 %v1084
    %1262 = vmatmul.bf16.gmra.mxu0 %v733
    %v1263 = vpop.f32.mrf.mxu0
    %v1264 = vadd.f32 %v1251, %v1263
    %v1265 = vpop.f32.mrf.mxu0
    %1266 = vdwg.mxu0
    %1267 = vmatpush.bf16.msra.mxu0 %v1114
    %1268 = vmatpush.bf16.msra.mxu0 %v1112
    %1269 = vmatpush.bf16.msra.mxu0 %v1110
    %1270 = vmatpush.bf16.msra.mxu0 %v1108
    %1271 = vmatpush.bf16.msra.mxu0 %v1106
    %1272 = vmatpush.bf16.msra.mxu0 %v1104
    %1273 = vmatpush.bf16.msra.mxu0 %v1102
    %1274 = vmatpush.bf16.msra.mxu0 %v1100
    %1275 = vmatmul.bf16.gmra.mxu0 %v734
    %v1276 = vpop.f32.mrf.mxu0
    %v1277 = vadd.f32 %v1264, %v1276
    %v1278 = vpop.f32.mrf.mxu0
    %1279 = vdwg.mxu0
    %1280 = vmatpush.bf16.msra.mxu0 %v1130
    %1281 = vmatpush.bf16.msra.mxu0 %v1128
    %1282 = vmatpush.bf16.msra.mxu0 %v1126
    %1283 = vmatpush.bf16.msra.mxu0 %v1124
    %1284 = vmatpush.bf16.msra.mxu0 %v1122
    %1285 = vmatpush.bf16.msra.mxu0 %v1120
    %1286 = vmatpush.bf16.msra.mxu0 %v1118
    %1287 = vmatpush.bf16.msra.mxu0 %v1116
    %1288 = vmatmul.bf16.gmra.mxu0 %v735
    %v1289 = vpop.f32.mrf.mxu0
    %v1290 = vadd.f32 %v1277, %v1289
    %v1291 = vpop.f32.mrf.mxu0
    %1292 = vdwg.mxu0
    %1293 = vmatpush.bf16.msra.mxu0 %v1146
    %1294 = vmatpush.bf16.msra.mxu0 %v1144
    %1295 = vmatpush.bf16.msra.mxu0 %v1142
    %1296 = vmatpush.bf16.msra.mxu0 %v1140
    %1297 = vmatpush.bf16.msra.mxu0 %v1138
    %1298 = vmatpush.bf16.msra.mxu0 %v1136
    %1299 = vmatpush.bf16.msra.mxu0 %v1134
    %1300 = vmatpush.bf16.msra.mxu0 %v1132
    %1301 = vmatmul.bf16.gmra.mxu0 %v736
    %v1302 = vpop.f32.mrf.mxu0
    %v1303 = vadd.f32 %v1290, %v1302
    %v1304 = vpop.f32.mrf.mxu0
    %1305 = vdwg.mxu0
    %1306 = vmatpush.bf16.msra.mxu0 0
    %1307 = vmatpush.bf16.msra.mxu0 0
    %1308 = vmatpush.bf16.msra.mxu0 0
    %1309 = vmatpush.bf16.msra.mxu0 0
    %1310 = vmatpush.bf16.msra.mxu0 0
    %1311 = vmatpush.bf16.msra.mxu0 0
    %1312 = vmatpush.bf16.msra.mxu0 0
    %1313 = vmatpush.bf16.msra.mxu0 %v1236
    %1314 = vmatmul.bf16.gmra.mxu0 %v1232
    %v1315 = vpop.f32.mrf.mxu0
    %v1316 = vadd.f32 %v1303, %v1315
    %v1317 = vpop.f32.mrf.mxu0
    %1318 = vdwg.mxu0
    %1319 = vmatpush.bf16.msra.mxu0 %v1083
    %1320 = vmatpush.bf16.msra.mxu0 %v1081
    %1321 = vmatpush.bf16.msra.mxu0 %v1079
    %1322 = vmatpush.bf16.msra.mxu0 %v1077
    %1323 = vmatpush.bf16.msra.mxu0 %v1075
    %1324 = vmatpush.bf16.msra.mxu0 %v1073
    %1325 = vmatpush.bf16.msra.mxu0 %v1071
    %1326 = vmatpush.bf16.msra.mxu0 %v1069
    %1327 = vmatmul.bf16.gmra.mxu0 %v732
    %v1328 = vpop.f32.mrf.mxu0
    %v1329 = vadd.f32 %v822, %v1328
    %v1330 = vpop.f32.mrf.mxu0
    %1331 = vdwg.mxu0
    %1332 = vmatpush.bf16.msra.mxu0 %v1099
    %1333 = vmatpush.bf16.msra.mxu0 %v1097
    %1334 = vmatpush.bf16.msra.mxu0 %v1095
    %1335 = vmatpush.bf16.msra.mxu0 %v1093
    %1336 = vmatpush.bf16.msra.mxu0 %v1091
    %1337 = vmatpush.bf16.msra.mxu0 %v1089
    %1338 = vmatpush.bf16.msra.mxu0 %v1087
    %1339 = vmatpush.bf16.msra.mxu0 %v1085
    %1340 = vmatmul.bf16.gmra.mxu0 %v733
    %v1341 = vpop.f32.mrf.mxu0
    %v1342 = vadd.f32 %v1329, %v1341
    %v1343 = vpop.f32.mrf.mxu0
    %1344 = vdwg.mxu0
    %1345 = vmatpush.bf16.msra.mxu0 %v1115
    %1346 = vmatpush.bf16.msra.mxu0 %v1113
    %1347 = vmatpush.bf16.msra.mxu0 %v1111
    %1348 = vmatpush.bf16.msra.mxu0 %v1109
    %1349 = vmatpush.bf16.msra.mxu0 %v1107
    %1350 = vmatpush.bf16.msra.mxu0 %v1105
    %1351 = vmatpush.bf16.msra.mxu0 %v1103
    %1352 = vmatpush.bf16.msra.mxu0 %v1101
    %1353 = vmatmul.bf16.gmra.mxu0 %v734
    %v1354 = vpop.f32.mrf.mxu0
    %v1355 = vadd.f32 %v1342, %v1354
    %v1356 = vpop.f32.mrf.mxu0
    %1357 = vdwg.mxu0
    %1358 = vmatpush.bf16.msra.mxu0 %v1131
    %1359 = vmatpush.bf16.msra.mxu0 %v1129
    %1360 = vmatpush.bf16.msra.mxu0 %v1127
    %1361 = vmatpush.bf16.msra.mxu0 %v1125
    %1362 = vmatpush.bf16.msra.mxu0 %v1123
    %1363 = vmatpush.bf16.msra.mxu0 %v1121
    %1364 = vmatpush.bf16.msra.mxu0 %v1119
    %1365 = vmatpush.bf16.msra.mxu0 %v1117
    %1366 = vmatmul.bf16.gmra.mxu0 %v735
    %v1367 = vpop.f32.mrf.mxu0
    %v1368 = vadd.f32 %v1355, %v1367
    %v1369 = vpop.f32.mrf.mxu0
    %1370 = vdwg.mxu0
    %1371 = vmatpush.bf16.msra.mxu0 %v1147
    %1372 = vmatpush.bf16.msra.mxu0 %v1145
    %1373 = vmatpush.bf16.msra.mxu0 %v1143
    %1374 = vmatpush.bf16.msra.mxu0 %v1141
    %1375 = vmatpush.bf16.msra.mxu0 %v1139
    %1376 = vmatpush.bf16.msra.mxu0 %v1137
    %1377 = vmatpush.bf16.msra.mxu0 %v1135
    %1378 = vmatpush.bf16.msra.mxu0 %v1133
    %1379 = vmatmul.bf16.gmra.mxu0 %v736
    %v1380 = vpop.f32.mrf.mxu0
    %v1381 = vadd.f32 %v1368, %v1380
    %v1382 = vpop.f32.mrf.mxu0
    %1383 = vdwg.mxu0
    %1384 = vmatpush.bf16.msra.mxu0 0
    %1385 = vmatpush.bf16.msra.mxu0 0
    %1386 = vmatpush.bf16.msra.mxu0 0
    %1387 = vmatpush.bf16.msra.mxu0 0
    %1388 = vmatpush.bf16.msra.mxu0 0
    %1389 = vmatpush.bf16.msra.mxu0 0
    %1390 = vmatpush.bf16.msra.mxu0 0
    %1391 = vmatpush.bf16.msra.mxu0 %v1239
    %1392 = vmatmul.bf16.gmra.mxu0 %v1232
    %v1393 = vpop.f32.mrf.mxu0
    %v1394 = vadd.f32 %v1381, %v1393
    %v1395 = vpop.f32.mrf.mxu0
    %1396 = vdwg.mxu0
    %v1397 = vmax.f32 %v1316, 0.0
    %v1398 = vmax.f32 %v1394, 0.0
    %v1399 = vld [vmem:[%s1] sm:$0x3]
    %v1400 = vld [vmem:[%s6] sm:$0xff]
    %v1401 = vld [vmem:[%s6 + $0x8] sm:$0xff]
    %v1402 = vld [vmem:[%s6 + $0x10] sm:$0xff]
    %v1403 = vld [vmem:[%s6 + $0x18] sm:$0xff]
    %v1404 = vld [vmem:[%s6 + $0x20] sm:$0xff]
    %v1405 = vld [vmem:[%s6 + $0x28] sm:$0xff]
    %v1406 = vld [vmem:[%s6 + $0x30] sm:$0xff]
    %v1407 = vld [vmem:[%s6 + $0x38] sm:$0xff]
    %v1408 = vld [vmem:[%s6 + $0x40] sm:$0xff]
    %v1409 = vld [vmem:[%s6 + $0x48] sm:$0xff]
    %v1410 = vld [vmem:[%s6 + $0x50] sm:$0xff]
    %v1411 = vld [vmem:[%s6 + $0x58] sm:$0xff]
    %v1412 = vld [vmem:[%s6 + $0x60] sm:$0xff]
    %v1413 = vld [vmem:[%s6 + $0x68] sm:$0xff]
    %v1414 = vld [vmem:[%s6 + $0x70] sm:$0xff]
    %v1415 = vld [vmem:[%s6 + $0x78] sm:$0xff]
    %v1416 = vld [vmem:[%s6 + $0x80] sm:$0xff]
    %v1417 = vld [vmem:[%s6 + $0x88] sm:$0xff]
    %v1418 = vld [vmem:[%s6 + $0x90] sm:$0xff]
    %v1419 = vld [vmem:[%s6 + $0x98] sm:$0xff]
    %v1420 = vld [vmem:[%s6 + $0xa0] sm:$0xff]
    %v1421 = vld [vmem:[%s6 + $0xa8] sm:$0xff]
    %v1422 = vld [vmem:[%s6 + $0xb0] sm:$0xff]
    %v1423 = vld [vmem:[%s6 + $0xb8] sm:$0xff]
    %v1424 = vld [vmem:[%s6 + $0xc0] sm:$0xff]
    %v1425 = vld [vmem:[%s6 + $0xc8] sm:$0xff]
    %v1426 = vld [vmem:[%s6 + $0xd0] sm:$0xff]
    %v1427 = vld [vmem:[%s6 + $0xd8] sm:$0xff]
    %v1428 = vld [vmem:[%s6 + $0xe0] sm:$0xff]
    %v1429 = vld [vmem:[%s6 + $0xe8] sm:$0xff]
    %v1430 = vld [vmem:[%s6 + $0xf0] sm:$0xff]
    %v1431 = vld [vmem:[%s6 + $0xf8] sm:$0xff]
    %v1432 = vld [vmem:[%s6 + $0x100] sm:$0xff]
    %v1433 = vld [vmem:[%s6 + $0x108] sm:$0xff]
    %v1434 = vld [vmem:[%s6 + $0x110] sm:$0xff]
    %v1435 = vld [vmem:[%s6 + $0x118] sm:$0xff]
    %v1436 = vld [vmem:[%s6 + $0x120] sm:$0xff]
    %v1437 = vld [vmem:[%s6 + $0x128] sm:$0xff]
    %v1438 = vld [vmem:[%s6 + $0x130] sm:$0xff]
    %v1439 = vld [vmem:[%s6 + $0x138] sm:$0xff]
    %v1440 = vld [vmem:[%s6 + $0x140] sm:$0xff]
    %v1441 = vld [vmem:[%s6 + $0x148] sm:$0xff]
    %v1442 = vld [vmem:[%s6 + $0x150] sm:$0xff]
    %v1443 = vld [vmem:[%s6 + $0x158] sm:$0xff]
    %v1444 = vld [vmem:[%s6 + $0x160] sm:$0xff]
    %v1445 = vld [vmem:[%s6 + $0x168] sm:$0xff]
    %v1446 = vld [vmem:[%s6 + $0x170] sm:$0xff]
    %v1447 = vld [vmem:[%s6 + $0x178] sm:$0xff]
    %v1448 = vld [vmem:[%s6 + $0x180] sm:$0xff]
    %v1449 = vld [vmem:[%s6 + $0x188] sm:$0xff]
    %v1450 = vld [vmem:[%s6 + $0x190] sm:$0xff]
    %v1451 = vld [vmem:[%s6 + $0x198] sm:$0xff]
    %v1452 = vld [vmem:[%s6 + $0x1a0] sm:$0xff]
    %v1453 = vld [vmem:[%s6 + $0x1a8] sm:$0xff]
    %v1454 = vld [vmem:[%s6 + $0x1b0] sm:$0xff]
    %v1455 = vld [vmem:[%s6 + $0x1b8] sm:$0xff]
    %v1456 = vld [vmem:[%s6 + $0x1c0] sm:$0xff]
    %v1457 = vld [vmem:[%s6 + $0x1c8] sm:$0xff]
    %v1458 = vld [vmem:[%s6 + $0x1d0] sm:$0xff]
    %v1459 = vld [vmem:[%s6 + $0x1d8] sm:$0xff]
    %v1460 = vld [vmem:[%s6 + $0x1e0] sm:$0xff]
    %v1461 = vld [vmem:[%s6 + $0x1e8] sm:$0xff]
    %v1462 = vld [vmem:[%s6 + $0x1f0] sm:$0xff]
    %v1463 = vld [vmem:[%s6 + $0x1f8] sm:$0xff]
    %v1464 = vld [vmem:[%s6 + $0x200] sm:$0xff]
    %v1465 = vld [vmem:[%s6 + $0x208] sm:$0xff]
    %v1466 = vld [vmem:[%s6 + $0x210] sm:$0xff]
    %v1467 = vld [vmem:[%s6 + $0x218] sm:$0xff]
    %v1468 = vld [vmem:[%s6 + $0x220] sm:$0xff]
    %v1469 = vld [vmem:[%s6 + $0x228] sm:$0xff]
    %v1470 = vld [vmem:[%s6 + $0x230] sm:$0xff]
    %v1471 = vld [vmem:[%s6 + $0x238] sm:$0xff]
    %v1472 = vld [vmem:[%s6 + $0x240] sm:$0xff]
    %v1473 = vld [vmem:[%s6 + $0x248] sm:$0xff]
    %v1474 = vld [vmem:[%s6 + $0x250] sm:$0xff]
    %v1475 = vld [vmem:[%s6 + $0x258] sm:$0xff]
    %v1476 = vld [vmem:[%s6 + $0x260] sm:$0xff]
    %v1477 = vld [vmem:[%s6 + $0x268] sm:$0xff]
    %v1478 = vld [vmem:[%s6 + $0x270] sm:$0xff]
    %v1479 = vld [vmem:[%s6 + $0x278] sm:$0xff]
    %v1480 = vld [vmem:[%s6 + $0x280] sm:$0xff]
    %v1481 = vld [vmem:[%s6 + $0x288] sm:$0xff]
    %v1482 = vld [vmem:[%s6 + $0x290] sm:$0xff]
    %v1483 = vld [vmem:[%s6 + $0x298] sm:$0xff]
    %v1484 = vld [vmem:[%s6 + $0x2a0] sm:$0xff]
    %v1485 = vld [vmem:[%s6 + $0x2a8] sm:$0xff]
    %v1486 = vld [vmem:[%s6 + $0x2b0] sm:$0xff]
    %v1487 = vld [vmem:[%s6 + $0x2b8] sm:$0xff]
    %v1488 = vld [vmem:[%s6 + $0x2c0] sm:$0xff]
    %v1489 = vld [vmem:[%s6 + $0x2c8] sm:$0xff]
    %v1490 = vld [vmem:[%s6 + $0x2d0] sm:$0xff]
    %v1491 = vld [vmem:[%s6 + $0x2d8] sm:$0xff]
    %v1492 = vld [vmem:[%s6 + $0x2e0] sm:$0xff]
    %v1493 = vld [vmem:[%s6 + $0x2e8] sm:$0xff]
    %v1494 = vld [vmem:[%s6 + $0x2f0] sm:$0xff]
    %v1495 = vld [vmem:[%s6 + $0x2f8] sm:$0xff]
    %v1496 = vld [vmem:[%s6 + $0x300] sm:$0xff]
    %v1497 = vld [vmem:[%s6 + $0x308] sm:$0xff]
    %v1498 = vld [vmem:[%s6 + $0x310] sm:$0xff]
    %v1499 = vld [vmem:[%s6 + $0x318] sm:$0xff]
    %v1500 = vld [vmem:[%s6 + $0x320] sm:$0xff]
    %v1501 = vld [vmem:[%s6 + $0x328] sm:$0xff]
    %v1502 = vld [vmem:[%s6 + $0x330] sm:$0xff]
    %v1503 = vld [vmem:[%s6 + $0x338] sm:$0xff]
    %v1504 = vld [vmem:[%s6 + $0x340] sm:$0xff]
    %v1505 = vld [vmem:[%s6 + $0x348] sm:$0xff]
    %v1506 = vld [vmem:[%s6 + $0x350] sm:$0xff]
    %v1507 = vld [vmem:[%s6 + $0x358] sm:$0xff]
    %v1508 = vld [vmem:[%s6 + $0x360] sm:$0xff]
    %v1509 = vld [vmem:[%s6 + $0x368] sm:$0xff]
    %v1510 = vld [vmem:[%s6 + $0x370] sm:$0xff]
    %v1511 = vld [vmem:[%s6 + $0x378] sm:$0xff]
    %v1512 = vld [vmem:[%s6 + $0x380] sm:$0xff]
    %v1513 = vld [vmem:[%s6 + $0x388] sm:$0xff]
    %v1514 = vld [vmem:[%s6 + $0x390] sm:$0xff]
    %v1515 = vld [vmem:[%s6 + $0x398] sm:$0xff]
    %v1516 = vld [vmem:[%s6 + $0x3a0] sm:$0xff]
    %v1517 = vld [vmem:[%s6 + $0x3a8] sm:$0xff]
    %v1518 = vld [vmem:[%s6 + $0x3b0] sm:$0xff]
    %v1519 = vld [vmem:[%s6 + $0x3b8] sm:$0xff]
    %v1520 = vld [vmem:[%s6 + $0x3c0] sm:$0xff]
    %v1521 = vld [vmem:[%s6 + $0x3c8] sm:$0xff]
    %v1522 = vld [vmem:[%s6 + $0x3d0] sm:$0xff]
    %v1523 = vld [vmem:[%s6 + $0x3d8] sm:$0xff]
    %v1524 = vld [vmem:[%s6 + $0x3e0] sm:$0xff]
    %v1525 = vld [vmem:[%s6 + $0x3e8] sm:$0xff]
    %v1526 = vld [vmem:[%s6 + $0x3f0] sm:$0xff]
    %v1527 = vld [vmem:[%s6 + $0x3f8] sm:$0xff]
    %v1528 = vld [vmem:[%s7] sm:$0x77]
    %v1529 = vld [vmem:[%s7 + $0x8] sm:$0x77]
    %1532 = vst [vmem:[#allocation1] ss:$2 sm:$0xff] %v1528
    %s1533 = scalar_lea.vmem [#allocation1], 16
    %1534 = vst [vmem:[%s1533] ss:$2 sm:$0xff] %v1529
    %v1535 = vld.sshfl [vmem:[#allocation1] sm:$0xff pattern:$0x75316420]
    %v1536 = vld.sshfl [vmem:[#allocation1 + $0x8] sm:$0xff pattern:$0x75316420]
    %v1537 = vld.sshfl [vmem:[#allocation1 + $0x10] sm:$0xff pattern:$0x75316420]
    %v1538 = vld.sshfl [vmem:[#allocation1 + $0x18] sm:$0xff pattern:$0x75316420]
    %vm1539 = vcmask 23552
    %v1541 = vsel %vm1539, %v1399, 0
    %vm1543 = vcmask 1042432
    %v1544 = vsel %vm1543, %v1535, 0
    %v1546 = vsel %vm1543, %v1536, 0
    %v1548 = vsel %vm1543, %v1537, 0
    %v1550 = vsel %vm1543, %v1538, 0
    %1552 = vmatpush.msra.mxu0 0.0
    %1553 = vmatpush.msra.mxu0 0.0
    %1554 = vmatpush.msra.mxu0 0.0
    %1555 = vmatpush.msra.mxu0 0.0
    %1556 = vmatpush.msra.mxu0 0.0
    %1557 = vmatpush.msra.mxu0 0.0
    %1558 = vmatpush.msra.mxu0 0.0
    %1559 = vmatpush.msra.mxu0 0.0
    %1560 = vmatpush.msra.mxu0 0.0
    %1561 = vmatpush.msra.mxu0 0.0
    %1562 = vmatpush.msra.mxu0 0.0
    %1563 = vmatpush.msra.mxu0 0.0
    %1564 = vmatpush.msra.mxu0 0.0
    %1565 = vmatpush.msra.mxu0 0.0
    %1566 = vmatpush.msra.mxu0 0.0
    %1567 = vmatpush.msra.mxu0 %v1544
    %1568 = vmatmul.f32.gmra.mxu0 %v1541
    %v1569 = vpop.f32.mrf.mxu0
    %v1570 = vadd.f32 0.0, %v1569
    %1571 = vdwg.mxu0
    %1572 = vmatpush.msra.mxu0 0.0
    %1573 = vmatpush.msra.mxu0 0.0
    %1574 = vmatpush.msra.mxu0 0.0
    %1575 = vmatpush.msra.mxu0 0.0
    %1576 = vmatpush.msra.mxu0 0.0
    %1577 = vmatpush.msra.mxu0 0.0
    %1578 = vmatpush.msra.mxu0 0.0
    %1579 = vmatpush.msra.mxu0 0.0
    %1580 = vmatpush.msra.mxu0 0.0
    %1581 = vmatpush.msra.mxu0 0.0
    %1582 = vmatpush.msra.mxu0 0.0
    %1583 = vmatpush.msra.mxu0 0.0
    %1584 = vmatpush.msra.mxu0 0.0
    %1585 = vmatpush.msra.mxu0 0.0
    %1586 = vmatpush.msra.mxu0 0.0
    %1587 = vmatpush.msra.mxu0 %v1546
    %1588 = vmatmul.f32.gmra.mxu0 %v1541
    %v1589 = vpop.f32.mrf.mxu0
    %v1590 = vadd.f32 0.0, %v1589
    %1591 = vdwg.mxu0
    %1592 = vmatpush.msra.mxu0 0.0
    %1593 = vmatpush.msra.mxu0 0.0
    %1594 = vmatpush.msra.mxu0 0.0
    %1595 = vmatpush.msra.mxu0 0.0
    %1596 = vmatpush.msra.mxu0 0.0
    %1597 = vmatpush.msra.mxu0 0.0
    %1598 = vmatpush.msra.mxu0 0.0
    %1599 = vmatpush.msra.mxu0 0.0
    %1600 = vmatpush.msra.mxu0 0.0
    %1601 = vmatpush.msra.mxu0 0.0
    %1602 = vmatpush.msra.mxu0 0.0
    %1603 = vmatpush.msra.mxu0 0.0
    %1604 = vmatpush.msra.mxu0 0.0
    %1605 = vmatpush.msra.mxu0 0.0
    %1606 = vmatpush.msra.mxu0 0.0
    %1607 = vmatpush.msra.mxu0 %v1548
    %1608 = vmatmul.f32.gmra.mxu0 %v1541
    %v1609 = vpop.f32.mrf.mxu0
    %v1610 = vadd.f32 0.0, %v1609
    %1611 = vdwg.mxu0
    %1612 = vmatpush.msra.mxu0 0.0
    %1613 = vmatpush.msra.mxu0 0.0
    %1614 = vmatpush.msra.mxu0 0.0
    %1615 = vmatpush.msra.mxu0 0.0
    %1616 = vmatpush.msra.mxu0 0.0
    %1617 = vmatpush.msra.mxu0 0.0
    %1618 = vmatpush.msra.mxu0 0.0
    %1619 = vmatpush.msra.mxu0 0.0
    %1620 = vmatpush.msra.mxu0 0.0
    %1621 = vmatpush.msra.mxu0 0.0
    %1622 = vmatpush.msra.mxu0 0.0
    %1623 = vmatpush.msra.mxu0 0.0
    %1624 = vmatpush.msra.mxu0 0.0
    %1625 = vmatpush.msra.mxu0 0.0
    %1626 = vmatpush.msra.mxu0 0.0
    %1627 = vmatpush.msra.mxu0 %v1550
    %1628 = vmatmul.f32.gmra.mxu0 %v1541
    %v1629 = vpop.f32.mrf.mxu0
    %v1630 = vadd.f32 0.0, %v1629
    %1631 = vdwg.mxu0
    %1632 = vmatpush.msra.mxu0 %v1460
    %1633 = vmatpush.msra.mxu0 %v1456
    %1634 = vmatpush.msra.mxu0 %v1452
    %1635 = vmatpush.msra.mxu0 %v1448
    %1636 = vmatpush.msra.mxu0 %v1444
    %1637 = vmatpush.msra.mxu0 %v1440
    %1638 = vmatpush.msra.mxu0 %v1436
    %1639 = vmatpush.msra.mxu0 %v1432
    %1640 = vmatpush.msra.mxu0 %v1428
    %1641 = vmatpush.msra.mxu0 %v1424
    %1642 = vmatpush.msra.mxu0 %v1420
    %1643 = vmatpush.msra.mxu0 %v1416
    %1644 = vmatpush.msra.mxu0 %v1412
    %1645 = vmatpush.msra.mxu0 %v1408
    %1646 = vmatpush.msra.mxu0 %v1404
    %1647 = vmatpush.msra.mxu0 %v1400
    %1648 = vmatmul.f32.gmra.mxu0 %v1397
    %v1649 = vpop.f32.mrf.mxu0
    %v1650 = vadd.f32 %v1570, %v1649
    %1651 = vdwg.mxu0
    %1652 = vmatpush.msra.mxu0 %v1524
    %1653 = vmatpush.msra.mxu0 %v1520
    %1654 = vmatpush.msra.mxu0 %v1516
    %1655 = vmatpush.msra.mxu0 %v1512
    %1656 = vmatpush.msra.mxu0 %v1508
    %1657 = vmatpush.msra.mxu0 %v1504
    %1658 = vmatpush.msra.mxu0 %v1500
    %1659 = vmatpush.msra.mxu0 %v1496
    %1660 = vmatpush.msra.mxu0 %v1492
    %1661 = vmatpush.msra.mxu0 %v1488
    %1662 = vmatpush.msra.mxu0 %v1484
    %1663 = vmatpush.msra.mxu0 %v1480
    %1664 = vmatpush.msra.mxu0 %v1476
    %1665 = vmatpush.msra.mxu0 %v1472
    %1666 = vmatpush.msra.mxu0 %v1468
    %1667 = vmatpush.msra.mxu0 %v1464
    %1668 = vmatmul.f32.gmra.mxu0 %v1398
    %v1669 = vpop.f32.mrf.mxu0
    %v1670 = vadd.f32 %v1650, %v1669
    %1671 = vdwg.mxu0
    %1672 = vmatpush.msra.mxu0 %v1461
    %1673 = vmatpush.msra.mxu0 %v1457
    %1674 = vmatpush.msra.mxu0 %v1453
    %1675 = vmatpush.msra.mxu0 %v1449
    %1676 = vmatpush.msra.mxu0 %v1445
    %1677 = vmatpush.msra.mxu0 %v1441
    %1678 = vmatpush.msra.mxu0 %v1437
    %1679 = vmatpush.msra.mxu0 %v1433
    %1680 = vmatpush.msra.mxu0 %v1429
    %1681 = vmatpush.msra.mxu0 %v1425
    %1682 = vmatpush.msra.mxu0 %v1421
    %1683 = vmatpush.msra.mxu0 %v1417
    %1684 = vmatpush.msra.mxu0 %v1413
    %1685 = vmatpush.msra.mxu0 %v1409
    %1686 = vmatpush.msra.mxu0 %v1405
    %1687 = vmatpush.msra.mxu0 %v1401
    %1688 = vmatmul.f32.gmra.mxu0 %v1397
    %v1689 = vpop.f32.mrf.mxu0
    %v1690 = vadd.f32 %v1590, %v1689
    %1691 = vdwg.mxu0
    %1692 = vmatpush.msra.mxu0 %v1525
    %1693 = vmatpush.msra.mxu0 %v1521
    %1694 = vmatpush.msra.mxu0 %v1517
    %1695 = vmatpush.msra.mxu0 %v1513
    %1696 = vmatpush.msra.mxu0 %v1509
    %1697 = vmatpush.msra.mxu0 %v1505
    %1698 = vmatpush.msra.mxu0 %v1501
    %1699 = vmatpush.msra.mxu0 %v1497
    %1700 = vmatpush.msra.mxu0 %v1493
    %1701 = vmatpush.msra.mxu0 %v1489
    %1702 = vmatpush.msra.mxu0 %v1485
    %1703 = vmatpush.msra.mxu0 %v1481
    %1704 = vmatpush.msra.mxu0 %v1477
    %1705 = vmatpush.msra.mxu0 %v1473
    %1706 = vmatpush.msra.mxu0 %v1469
    %1707 = vmatpush.msra.mxu0 %v1465
    %1708 = vmatmul.f32.gmra.mxu0 %v1398
    %v1709 = vpop.f32.mrf.mxu0
    %v1710 = vadd.f32 %v1690, %v1709
    %1711 = vdwg.mxu0
    %1712 = vmatpush.msra.mxu0 %v1462
    %1713 = vmatpush.msra.mxu0 %v1458
    %1714 = vmatpush.msra.mxu0 %v1454
    %1715 = vmatpush.msra.mxu0 %v1450
    %1716 = vmatpush.msra.mxu0 %v1446
    %1717 = vmatpush.msra.mxu0 %v1442
    %1718 = vmatpush.msra.mxu0 %v1438
    %1719 = vmatpush.msra.mxu0 %v1434
    %1720 = vmatpush.msra.mxu0 %v1430
    %1721 = vmatpush.msra.mxu0 %v1426
    %1722 = vmatpush.msra.mxu0 %v1422
    %1723 = vmatpush.msra.mxu0 %v1418
    %1724 = vmatpush.msra.mxu0 %v1414
    %1725 = vmatpush.msra.mxu0 %v1410
    %1726 = vmatpush.msra.mxu0 %v1406
    %1727 = vmatpush.msra.mxu0 %v1402
    %1728 = vmatmul.f32.gmra.mxu0 %v1397
    %v1729 = vpop.f32.mrf.mxu0
    %v1730 = vadd.f32 %v1610, %v1729
    %1731 = vdwg.mxu0
    %1732 = vmatpush.msra.mxu0 %v1526
    %1733 = vmatpush.msra.mxu0 %v1522
    %1734 = vmatpush.msra.mxu0 %v1518
    %1735 = vmatpush.msra.mxu0 %v1514
    %1736 = vmatpush.msra.mxu0 %v1510
    %1737 = vmatpush.msra.mxu0 %v1506
    %1738 = vmatpush.msra.mxu0 %v1502
    %1739 = vmatpush.msra.mxu0 %v1498
    %1740 = vmatpush.msra.mxu0 %v1494
    %1741 = vmatpush.msra.mxu0 %v1490
    %1742 = vmatpush.msra.mxu0 %v1486
    %1743 = vmatpush.msra.mxu0 %v1482
    %1744 = vmatpush.msra.mxu0 %v1478
    %1745 = vmatpush.msra.mxu0 %v1474
    %1746 = vmatpush.msra.mxu0 %v1470
    %1747 = vmatpush.msra.mxu0 %v1466
    %1748 = vmatmul.f32.gmra.mxu0 %v1398
    %v1749 = vpop.f32.mrf.mxu0
    %v1750 = vadd.f32 %v1730, %v1749
    %1751 = vdwg.mxu0
    %1752 = vmatpush.msra.mxu0 %v1463
    %1753 = vmatpush.msra.mxu0 %v1459
    %1754 = vmatpush.msra.mxu0 %v1455
    %1755 = vmatpush.msra.mxu0 %v1451
    %1756 = vmatpush.msra.mxu0 %v1447
    %1757 = vmatpush.msra.mxu0 %v1443
    %1758 = vmatpush.msra.mxu0 %v1439
    %1759 = vmatpush.msra.mxu0 %v1435
    %1760 = vmatpush.msra.mxu0 %v1431
    %1761 = vmatpush.msra.mxu0 %v1427
    %1762 = vmatpush.msra.mxu0 %v1423
    %1763 = vmatpush.msra.mxu0 %v1419
    %1764 = vmatpush.msra.mxu0 %v1415
    %1765 = vmatpush.msra.mxu0 %v1411
    %1766 = vmatpush.msra.mxu0 %v1407
    %1767 = vmatpush.msra.mxu0 %v1403
    %1768 = vmatmul.f32.gmra.mxu0 %v1397
    %v1769 = vpop.f32.mrf.mxu0
    %v1770 = vadd.f32 %v1630, %v1769
    %1771 = vdwg.mxu0
    %1772 = vmatpush.msra.mxu0 %v1527
    %1773 = vmatpush.msra.mxu0 %v1523
    %1774 = vmatpush.msra.mxu0 %v1519
    %1775 = vmatpush.msra.mxu0 %v1515
    %1776 = vmatpush.msra.mxu0 %v1511
    %1777 = vmatpush.msra.mxu0 %v1507
    %1778 = vmatpush.msra.mxu0 %v1503
    %1779 = vmatpush.msra.mxu0 %v1499
    %1780 = vmatpush.msra.mxu0 %v1495
    %1781 = vmatpush.msra.mxu0 %v1491
    %1782 = vmatpush.msra.mxu0 %v1487
    %1783 = vmatpush.msra.mxu0 %v1483
    %1784 = vmatpush.msra.mxu0 %v1479
    %1785 = vmatpush.msra.mxu0 %v1475
    %1786 = vmatpush.msra.mxu0 %v1471
    %1787 = vmatpush.msra.mxu0 %v1467
    %1788 = vmatmul.f32.gmra.mxu0 %v1398
    %v1789 = vpop.f32.mrf.mxu0
    %v1790 = vadd.f32 %v1770, %v1789
    %1791 = vdwg.mxu0
    %v1792 = vld [vmem:[%s8] sm:$0xf]
    %v1794 = vperm.slane %v1792, 0
    %v1795 = vperm.slane %v1792, 1
    %v1796 = vperm.slane %v1792, 2
    %v1797 = vperm.slane %v1792, 3
    %v1802 = vadd.f32 %v1670, %v1794
    %v1803 = vadd.f32 %v1710, %v1795
    %v1804 = vadd.f32 %v1750, %v1796
    %v1805 = vadd.f32 %v1790, %v1797
    %v1806 = vmax.f32 %v1802, 0.0
    %v1807 = vmax.f32 %v1803, 0.0
    %v1808 = vmax.f32 %v1804, 0.0
    %v1809 = vmax.f32 %v1805, 0.0
    %v1810 = vld [vmem:[%s9] sm:$0xff]
    %v1811 = vld [vmem:[%s9 + $0x8] sm:$0xff]
    %v1812 = vld [vmem:[%s9 + $0x10] sm:$0xff]
    %v1813 = vld [vmem:[%s9 + $0x18] sm:$0xff]
    %v1814 = vld [vmem:[%s9 + $0x20] sm:$0xff]
    %v1815 = vld [vmem:[%s9 + $0x28] sm:$0xff]
    %v1816 = vld [vmem:[%s9 + $0x30] sm:$0xff]
    %v1817 = vld [vmem:[%s9 + $0x38] sm:$0xff]
    %v1818 = vld [vmem:[%s9 + $0x40] sm:$0xff]
    %v1819 = vld [vmem:[%s9 + $0x48] sm:$0xff]
    %v1820 = vld [vmem:[%s9 + $0x50] sm:$0xff]
    %v1821 = vld [vmem:[%s9 + $0x58] sm:$0xff]
    %v1822 = vld [vmem:[%s9 + $0x60] sm:$0xff]
    %v1823 = vld [vmem:[%s9 + $0x68] sm:$0xff]
    %v1824 = vld [vmem:[%s9 + $0x70] sm:$0xff]
    %v1825 = vld [vmem:[%s9 + $0x78] sm:$0xff]
    %v1826 = vld [vmem:[%s9 + $0x80] sm:$0xff]
    %v1827 = vld [vmem:[%s9 + $0x88] sm:$0xff]
    %v1828 = vld [vmem:[%s9 + $0x90] sm:$0xff]
    %v1829 = vld [vmem:[%s9 + $0x98] sm:$0xff]
    %v1830 = vld [vmem:[%s9 + $0xa0] sm:$0xff]
    %v1831 = vld [vmem:[%s9 + $0xa8] sm:$0xff]
    %v1832 = vld [vmem:[%s9 + $0xb0] sm:$0xff]
    %v1833 = vld [vmem:[%s9 + $0xb8] sm:$0xff]
    %v1834 = vld [vmem:[%s9 + $0xc0] sm:$0xff]
    %v1835 = vld [vmem:[%s9 + $0xc8] sm:$0xff]
    %v1836 = vld [vmem:[%s9 + $0xd0] sm:$0xff]
    %v1837 = vld [vmem:[%s9 + $0xd8] sm:$0xff]
    %v1838 = vld [vmem:[%s9 + $0xe0] sm:$0xff]
    %v1839 = vld [vmem:[%s9 + $0xe8] sm:$0xff]
    %v1840 = vld [vmem:[%s9 + $0xf0] sm:$0xff]
    %v1841 = vld [vmem:[%s9 + $0xf8] sm:$0xff]
    %v1842 = vld [vmem:[%s9 + $0x100] sm:$0xff]
    %v1843 = vld [vmem:[%s9 + $0x108] sm:$0xff]
    %v1844 = vld [vmem:[%s9 + $0x110] sm:$0xff]
    %v1845 = vld [vmem:[%s9 + $0x118] sm:$0xff]
    %v1846 = vld [vmem:[%s9 + $0x120] sm:$0xff]
    %v1847 = vld [vmem:[%s9 + $0x128] sm:$0xff]
    %v1848 = vld [vmem:[%s9 + $0x130] sm:$0xff]
    %v1849 = vld [vmem:[%s9 + $0x138] sm:$0xff]
    %v1850 = vld [vmem:[%s9 + $0x140] sm:$0xff]
    %v1851 = vld [vmem:[%s9 + $0x148] sm:$0xff]
    %v1852 = vld [vmem:[%s9 + $0x150] sm:$0xff]
    %v1853 = vld [vmem:[%s9 + $0x158] sm:$0xff]
    %v1854 = vld [vmem:[%s9 + $0x160] sm:$0xff]
    %v1855 = vld [vmem:[%s9 + $0x168] sm:$0xff]
    %v1856 = vld [vmem:[%s9 + $0x170] sm:$0xff]
    %v1857 = vld [vmem:[%s9 + $0x178] sm:$0xff]
    %v1858 = vld [vmem:[%s9 + $0x180] sm:$0xff]
    %v1859 = vld [vmem:[%s9 + $0x188] sm:$0xff]
    %v1860 = vld [vmem:[%s9 + $0x190] sm:$0xff]
    %v1861 = vld [vmem:[%s9 + $0x198] sm:$0xff]
    %v1862 = vld [vmem:[%s9 + $0x1a0] sm:$0xff]
    %v1863 = vld [vmem:[%s9 + $0x1a8] sm:$0xff]
    %v1864 = vld [vmem:[%s9 + $0x1b0] sm:$0xff]
    %v1865 = vld [vmem:[%s9 + $0x1b8] sm:$0xff]
    %v1866 = vld [vmem:[%s9 + $0x1c0] sm:$0xff]
    %v1867 = vld [vmem:[%s9 + $0x1c8] sm:$0xff]
    %v1868 = vld [vmem:[%s9 + $0x1d0] sm:$0xff]
    %v1869 = vld [vmem:[%s9 + $0x1d8] sm:$0xff]
    %v1870 = vld [vmem:[%s9 + $0x1e0] sm:$0xff]
    %v1871 = vld [vmem:[%s9 + $0x1e8] sm:$0xff]
    %v1872 = vld [vmem:[%s9 + $0x1f0] sm:$0xff]
    %v1873 = vld [vmem:[%s9 + $0x1f8] sm:$0xff]
    %v1874 = vld [vmem:[%s9 + $0x200] sm:$0xff]
    %v1875 = vld [vmem:[%s9 + $0x208] sm:$0xff]
    %v1876 = vld [vmem:[%s9 + $0x210] sm:$0xff]
    %v1877 = vld [vmem:[%s9 + $0x218] sm:$0xff]
    %v1878 = vld [vmem:[%s9 + $0x220] sm:$0xff]
    %v1879 = vld [vmem:[%s9 + $0x228] sm:$0xff]
    %v1880 = vld [vmem:[%s9 + $0x230] sm:$0xff]
    %v1881 = vld [vmem:[%s9 + $0x238] sm:$0xff]
    %v1882 = vld [vmem:[%s9 + $0x240] sm:$0xff]
    %v1883 = vld [vmem:[%s9 + $0x248] sm:$0xff]
    %v1884 = vld [vmem:[%s9 + $0x250] sm:$0xff]
    %v1885 = vld [vmem:[%s9 + $0x258] sm:$0xff]
    %v1886 = vld [vmem:[%s9 + $0x260] sm:$0xff]
    %v1887 = vld [vmem:[%s9 + $0x268] sm:$0xff]
    %v1888 = vld [vmem:[%s9 + $0x270] sm:$0xff]
    %v1889 = vld [vmem:[%s9 + $0x278] sm:$0xff]
    %v1890 = vld [vmem:[%s9 + $0x280] sm:$0xff]
    %v1891 = vld [vmem:[%s9 + $0x288] sm:$0xff]
    %v1892 = vld [vmem:[%s9 + $0x290] sm:$0xff]
    %v1893 = vld [vmem:[%s9 + $0x298] sm:$0xff]
    %v1894 = vld [vmem:[%s9 + $0x2a0] sm:$0xff]
    %v1895 = vld [vmem:[%s9 + $0x2a8] sm:$0xff]
    %v1896 = vld [vmem:[%s9 + $0x2b0] sm:$0xff]
    %v1897 = vld [vmem:[%s9 + $0x2b8] sm:$0xff]
    %v1898 = vld [vmem:[%s9 + $0x2c0] sm:$0xff]
    %v1899 = vld [vmem:[%s9 + $0x2c8] sm:$0xff]
    %v1900 = vld [vmem:[%s9 + $0x2d0] sm:$0xff]
    %v1901 = vld [vmem:[%s9 + $0x2d8] sm:$0xff]
    %v1902 = vld [vmem:[%s9 + $0x2e0] sm:$0xff]
    %v1903 = vld [vmem:[%s9 + $0x2e8] sm:$0xff]
    %v1904 = vld [vmem:[%s9 + $0x2f0] sm:$0xff]
    %v1905 = vld [vmem:[%s9 + $0x2f8] sm:$0xff]
    %v1906 = vld [vmem:[%s9 + $0x300] sm:$0xff]
    %v1907 = vld [vmem:[%s9 + $0x308] sm:$0xff]
    %v1908 = vld [vmem:[%s9 + $0x310] sm:$0xff]
    %v1909 = vld [vmem:[%s9 + $0x318] sm:$0xff]
    %v1910 = vld [vmem:[%s9 + $0x320] sm:$0xff]
    %v1911 = vld [vmem:[%s9 + $0x328] sm:$0xff]
    %v1912 = vld [vmem:[%s9 + $0x330] sm:$0xff]
    %v1913 = vld [vmem:[%s9 + $0x338] sm:$0xff]
    %v1914 = vld [vmem:[%s9 + $0x340] sm:$0xff]
    %v1915 = vld [vmem:[%s9 + $0x348] sm:$0xff]
    %v1916 = vld [vmem:[%s9 + $0x350] sm:$0xff]
    %v1917 = vld [vmem:[%s9 + $0x358] sm:$0xff]
    %v1918 = vld [vmem:[%s9 + $0x360] sm:$0xff]
    %v1919 = vld [vmem:[%s9 + $0x368] sm:$0xff]
    %v1920 = vld [vmem:[%s9 + $0x370] sm:$0xff]
    %v1921 = vld [vmem:[%s9 + $0x378] sm:$0xff]
    %v1922 = vld [vmem:[%s9 + $0x380] sm:$0xff]
    %v1923 = vld [vmem:[%s9 + $0x388] sm:$0xff]
    %v1924 = vld [vmem:[%s9 + $0x390] sm:$0xff]
    %v1925 = vld [vmem:[%s9 + $0x398] sm:$0xff]
    %v1926 = vld [vmem:[%s9 + $0x3a0] sm:$0xff]
    %v1927 = vld [vmem:[%s9 + $0x3a8] sm:$0xff]
    %v1928 = vld [vmem:[%s9 + $0x3b0] sm:$0xff]
    %v1929 = vld [vmem:[%s9 + $0x3b8] sm:$0xff]
    %v1930 = vld [vmem:[%s9 + $0x3c0] sm:$0xff]
    %v1931 = vld [vmem:[%s9 + $0x3c8] sm:$0xff]
    %v1932 = vld [vmem:[%s9 + $0x3d0] sm:$0xff]
    %v1933 = vld [vmem:[%s9 + $0x3d8] sm:$0xff]
    %v1934 = vld [vmem:[%s9 + $0x3e0] sm:$0xff]
    %v1935 = vld [vmem:[%s9 + $0x3e8] sm:$0xff]
    %v1936 = vld [vmem:[%s9 + $0x3f0] sm:$0xff]
    %v1937 = vld [vmem:[%s9 + $0x3f8] sm:$0xff]
    %v1938 = vld [vmem:[%s9 + $0x400] sm:$0xff]
    %v1939 = vld [vmem:[%s9 + $0x408] sm:$0xff]
    %v1940 = vld [vmem:[%s9 + $0x410] sm:$0xff]
    %v1941 = vld [vmem:[%s9 + $0x418] sm:$0xff]
    %v1942 = vld [vmem:[%s9 + $0x420] sm:$0xff]
    %v1943 = vld [vmem:[%s9 + $0x428] sm:$0xff]
    %v1944 = vld [vmem:[%s9 + $0x430] sm:$0xff]
    %v1945 = vld [vmem:[%s9 + $0x438] sm:$0xff]
    %v1946 = vld [vmem:[%s9 + $0x440] sm:$0xff]
    %v1947 = vld [vmem:[%s9 + $0x448] sm:$0xff]
    %v1948 = vld [vmem:[%s9 + $0x450] sm:$0xff]
    %v1949 = vld [vmem:[%s9 + $0x458] sm:$0xff]
    %v1950 = vld [vmem:[%s9 + $0x460] sm:$0xff]
    %v1951 = vld [vmem:[%s9 + $0x468] sm:$0xff]
    %v1952 = vld [vmem:[%s9 + $0x470] sm:$0xff]
    %v1953 = vld [vmem:[%s9 + $0x478] sm:$0xff]
    %v1954 = vld [vmem:[%s9 + $0x480] sm:$0xff]
    %v1955 = vld [vmem:[%s9 + $0x488] sm:$0xff]
    %v1956 = vld [vmem:[%s9 + $0x490] sm:$0xff]
    %v1957 = vld [vmem:[%s9 + $0x498] sm:$0xff]
    %v1958 = vld [vmem:[%s9 + $0x4a0] sm:$0xff]
    %v1959 = vld [vmem:[%s9 + $0x4a8] sm:$0xff]
    %v1960 = vld [vmem:[%s10] sm:$0x7]
    %v1962 = vperm.slane %v1960, 0
    %v1963 = vperm.slane %v1960, 1
    %v1964 = vperm.slane %v1960, 2
    %vm1968 = vcmask 130048
    %v1970 = vsel %vm1968, %v1809, 0
    %1972 = vmatpush.msra.mxu0 %v1855
    %1973 = vmatpush.msra.mxu0 %v1852
    %1974 = vmatpush.msra.mxu0 %v1849
    %1975 = vmatpush.msra.mxu0 %v1846
    %1976 = vmatpush.msra.mxu0 %v1843
    %1977 = vmatpush.msra.mxu0 %v1840
    %1978 = vmatpush.msra.mxu0 %v1837
    %1979 = vmatpush.msra.mxu0 %v1834
    %1980 = vmatpush.msra.mxu0 %v1831
    %1981 = vmatpush.msra.mxu0 %v1828
    %1982 = vmatpush.msra.mxu0 %v1825
    %1983 = vmatpush.msra.mxu0 %v1822
    %1984 = vmatpush.msra.mxu0 %v1819
    %1985 = vmatpush.msra.mxu0 %v1816
    %1986 = vmatpush.msra.mxu0 %v1813
    %1987 = vmatpush.msra.mxu0 %v1810
    %1988 = vmatmul.f32.gmra.mxu0 %v1806
    %v1989 = vpop.f32.mrf.mxu0
    %v1990 = vadd.f32 %v1962, %v1989
    %1991 = vdwg.mxu0
    %1992 = vmatpush.msra.mxu0 %v1903
    %1993 = vmatpush.msra.mxu0 %v1900
    %1994 = vmatpush.msra.mxu0 %v1897
    %1995 = vmatpush.msra.mxu0 %v1894
    %1996 = vmatpush.msra.mxu0 %v1891
    %1997 = vmatpush.msra.mxu0 %v1888
    %1998 = vmatpush.msra.mxu0 %v1885
    %1999 = vmatpush.msra.mxu0 %v1882
    %2000 = vmatpush.msra.mxu0 %v1879
    %2001 = vmatpush.msra.mxu0 %v1876
    %2002 = vmatpush.msra.mxu0 %v1873
    %2003 = vmatpush.msra.mxu0 %v1870
    %2004 = vmatpush.msra.mxu0 %v1867
    %2005 = vmatpush.msra.mxu0 %v1864
    %2006 = vmatpush.msra.mxu0 %v1861
    %2007 = vmatpush.msra.mxu0 %v1858
    %2008 = vmatmul.f32.gmra.mxu0 %v1807
    %v2009 = vpop.f32.mrf.mxu0
    %v2010 = vadd.f32 %v1990, %v2009
    %2011 = vdwg.mxu0
    %2012 = vmatpush.msra.mxu0 %v1951
    %2013 = vmatpush.msra.mxu0 %v1948
    %2014 = vmatpush.msra.mxu0 %v1945
    %2015 = vmatpush.msra.mxu0 %v1942
    %2016 = vmatpush.msra.mxu0 %v1939
    %2017 = vmatpush.msra.mxu0 %v1936
    %2018 = vmatpush.msra.mxu0 %v1933
    %2019 = vmatpush.msra.mxu0 %v1930
    %2020 = vmatpush.msra.mxu0 %v1927
    %2021 = vmatpush.msra.mxu0 %v1924
    %2022 = vmatpush.msra.mxu0 %v1921
    %2023 = vmatpush.msra.mxu0 %v1918
    %2024 = vmatpush.msra.mxu0 %v1915
    %2025 = vmatpush.msra.mxu0 %v1912
    %2026 = vmatpush.msra.mxu0 %v1909
    %2027 = vmatpush.msra.mxu0 %v1906
    %2028 = vmatmul.f32.gmra.mxu0 %v1808
    %v2029 = vpop.f32.mrf.mxu0
    %v2030 = vadd.f32 %v2010, %v2029
    %2031 = vdwg.mxu0
    %2032 = vmatpush.msra.mxu0 0.0
    %2033 = vmatpush.msra.mxu0 0.0
    %2034 = vmatpush.msra.mxu0 0.0
    %2035 = vmatpush.msra.mxu0 0.0
    %2036 = vmatpush.msra.mxu0 0.0
    %2037 = vmatpush.msra.mxu0 0.0
    %2038 = vmatpush.msra.mxu0 0.0
    %2039 = vmatpush.msra.mxu0 0.0
    %2040 = vmatpush.msra.mxu0 0.0
    %2041 = vmatpush.msra.mxu0 0.0
    %2042 = vmatpush.msra.mxu0 0.0
    %2043 = vmatpush.msra.mxu0 0.0
    %2044 = vmatpush.msra.mxu0 0.0
    %2045 = vmatpush.msra.mxu0 0.0
    %2046 = vmatpush.msra.mxu0 %v1957
    %2047 = vmatpush.msra.mxu0 %v1954
    %2048 = vmatmul.f32.gmra.mxu0 %v1970
    %v2049 = vpop.f32.mrf.mxu0
    %v2050 = vadd.f32 %v2030, %v2049
    %2051 = vdwg.mxu0
    %2052 = vmatpush.msra.mxu0 %v1856
    %2053 = vmatpush.msra.mxu0 %v1853
    %2054 = vmatpush.msra.mxu0 %v1850
    %2055 = vmatpush.msra.mxu0 %v1847
    %2056 = vmatpush.msra.mxu0 %v1844
    %2057 = vmatpush.msra.mxu0 %v1841
    %2058 = vmatpush.msra.mxu0 %v1838
    %2059 = vmatpush.msra.mxu0 %v1835
    %2060 = vmatpush.msra.mxu0 %v1832
    %2061 = vmatpush.msra.mxu0 %v1829
    %2062 = vmatpush.msra.mxu0 %v1826
    %2063 = vmatpush.msra.mxu0 %v1823
    %2064 = vmatpush.msra.mxu0 %v1820
    %2065 = vmatpush.msra.mxu0 %v1817
    %2066 = vmatpush.msra.mxu0 %v1814
    %2067 = vmatpush.msra.mxu0 %v1811
    %2068 = vmatmul.f32.gmra.mxu0 %v1806
    %v2069 = vpop.f32.mrf.mxu0
    %v2070 = vadd.f32 %v1963, %v2069
    %2071 = vdwg.mxu0
    %2072 = vmatpush.msra.mxu0 %v1904
    %2073 = vmatpush.msra.mxu0 %v1901
    %2074 = vmatpush.msra.mxu0 %v1898
    %2075 = vmatpush.msra.mxu0 %v1895
    %2076 = vmatpush.msra.mxu0 %v1892
    %2077 = vmatpush.msra.mxu0 %v1889
    %2078 = vmatpush.msra.mxu0 %v1886
    %2079 = vmatpush.msra.mxu0 %v1883
    %2080 = vmatpush.msra.mxu0 %v1880
    %2081 = vmatpush.msra.mxu0 %v1877
    %2082 = vmatpush.msra.mxu0 %v1874
    %2083 = vmatpush.msra.mxu0 %v1871
    %2084 = vmatpush.msra.mxu0 %v1868
    %2085 = vmatpush.msra.mxu0 %v1865
    %2086 = vmatpush.msra.mxu0 %v1862
    %2087 = vmatpush.msra.mxu0 %v1859
    %2088 = vmatmul.f32.gmra.mxu0 %v1807
    %v2089 = vpop.f32.mrf.mxu0
    %v2090 = vadd.f32 %v2070, %v2089
    %2091 = vdwg.mxu0
    %2092 = vmatpush.msra.mxu0 %v1952
    %2093 = vmatpush.msra.mxu0 %v1949
    %2094 = vmatpush.msra.mxu0 %v1946
    %2095 = vmatpush.msra.mxu0 %v1943
    %2096 = vmatpush.msra.mxu0 %v1940
    %2097 = vmatpush.msra.mxu0 %v1937
    %2098 = vmatpush.msra.mxu0 %v1934
    %2099 = vmatpush.msra.mxu0 %v1931
    %2100 = vmatpush.msra.mxu0 %v1928
    %2101 = vmatpush.msra.mxu0 %v1925
    %2102 = vmatpush.msra.mxu0 %v1922
    %2103 = vmatpush.msra.mxu0 %v1919
    %2104 = vmatpush.msra.mxu0 %v1916
    %2105 = vmatpush.msra.mxu0 %v1913
    %2106 = vmatpush.msra.mxu0 %v1910
    %2107 = vmatpush.msra.mxu0 %v1907
    %2108 = vmatmul.f32.gmra.mxu0 %v1808
    %v2109 = vpop.f32.mrf.mxu0
    %v2110 = vadd.f32 %v2090, %v2109
    %2111 = vdwg.mxu0
    %2112 = vmatpush.msra.mxu0 0.0
    %2113 = vmatpush.msra.mxu0 0.0
    %2114 = vmatpush.msra.mxu0 0.0
    %2115 = vmatpush.msra.mxu0 0.0
    %2116 = vmatpush.msra.mxu0 0.0
    %2117 = vmatpush.msra.mxu0 0.0
    %2118 = vmatpush.msra.mxu0 0.0
    %2119 = vmatpush.msra.mxu0 0.0
    %2120 = vmatpush.msra.mxu0 0.0
    %2121 = vmatpush.msra.mxu0 0.0
    %2122 = vmatpush.msra.mxu0 0.0
    %2123 = vmatpush.msra.mxu0 0.0
    %2124 = vmatpush.msra.mxu0 0.0
    %2125 = vmatpush.msra.mxu0 0.0
    %2126 = vmatpush.msra.mxu0 %v1958
    %2127 = vmatpush.msra.mxu0 %v1955
    %2128 = vmatmul.f32.gmra.mxu0 %v1970
    %v2129 = vpop.f32.mrf.mxu0
    %v2130 = vadd.f32 %v2110, %v2129
    %2131 = vdwg.mxu0
    %2132 = vmatpush.msra.mxu0 %v1857
    %2133 = vmatpush.msra.mxu0 %v1854
    %2134 = vmatpush.msra.mxu0 %v1851
    %2135 = vmatpush.msra.mxu0 %v1848
    %2136 = vmatpush.msra.mxu0 %v1845
    %2137 = vmatpush.msra.mxu0 %v1842
    %2138 = vmatpush.msra.mxu0 %v1839
    %2139 = vmatpush.msra.mxu0 %v1836
    %2140 = vmatpush.msra.mxu0 %v1833
    %2141 = vmatpush.msra.mxu0 %v1830
    %2142 = vmatpush.msra.mxu0 %v1827
    %2143 = vmatpush.msra.mxu0 %v1824
    %2144 = vmatpush.msra.mxu0 %v1821
    %2145 = vmatpush.msra.mxu0 %v1818
    %2146 = vmatpush.msra.mxu0 %v1815
    %2147 = vmatpush.msra.mxu0 %v1812
    %2148 = vmatmul.f32.gmra.mxu0 %v1806
    %v2149 = vpop.f32.mrf.mxu0
    %v2150 = vadd.f32 %v1964, %v2149
    %2151 = vdwg.mxu0
    %2152 = vmatpush.msra.mxu0 %v1905
    %2153 = vmatpush.msra.mxu0 %v1902
    %2154 = vmatpush.msra.mxu0 %v1899
    %2155 = vmatpush.msra.mxu0 %v1896
    %2156 = vmatpush.msra.mxu0 %v1893
    %2157 = vmatpush.msra.mxu0 %v1890
    %2158 = vmatpush.msra.mxu0 %v1887
    %2159 = vmatpush.msra.mxu0 %v1884
    %2160 = vmatpush.msra.mxu0 %v1881
    %2161 = vmatpush.msra.mxu0 %v1878
    %2162 = vmatpush.msra.mxu0 %v1875
    %2163 = vmatpush.msra.mxu0 %v1872
    %2164 = vmatpush.msra.mxu0 %v1869
    %2165 = vmatpush.msra.mxu0 %v1866
    %2166 = vmatpush.msra.mxu0 %v1863
    %2167 = vmatpush.msra.mxu0 %v1860
    %2168 = vmatmul.f32.gmra.mxu0 %v1807
    %v2169 = vpop.f32.mrf.mxu0
    %v2170 = vadd.f32 %v2150, %v2169
    %2171 = vdwg.mxu0
    %2172 = vmatpush.msra.mxu0 %v1953
    %2173 = vmatpush.msra.mxu0 %v1950
    %2174 = vmatpush.msra.mxu0 %v1947
    %2175 = vmatpush.msra.mxu0 %v1944
    %2176 = vmatpush.msra.mxu0 %v1941
    %2177 = vmatpush.msra.mxu0 %v1938
    %2178 = vmatpush.msra.mxu0 %v1935
    %2179 = vmatpush.msra.mxu0 %v1932
    %2180 = vmatpush.msra.mxu0 %v1929
    %2181 = vmatpush.msra.mxu0 %v1926
    %2182 = vmatpush.msra.mxu0 %v1923
    %2183 = vmatpush.msra.mxu0 %v1920
    %2184 = vmatpush.msra.mxu0 %v1917
    %2185 = vmatpush.msra.mxu0 %v1914
    %2186 = vmatpush.msra.mxu0 %v1911
    %2187 = vmatpush.msra.mxu0 %v1908
    %2188 = vmatmul.f32.gmra.mxu0 %v1808
    %v2189 = vpop.f32.mrf.mxu0
    %v2190 = vadd.f32 %v2170, %v2189
    %2191 = vdwg.mxu0
    %2192 = vmatpush.msra.mxu0 0.0
    %2193 = vmatpush.msra.mxu0 0.0
    %2194 = vmatpush.msra.mxu0 0.0
    %2195 = vmatpush.msra.mxu0 0.0
    %2196 = vmatpush.msra.mxu0 0.0
    %2197 = vmatpush.msra.mxu0 0.0
    %2198 = vmatpush.msra.mxu0 0.0
    %2199 = vmatpush.msra.mxu0 0.0
    %2200 = vmatpush.msra.mxu0 0.0
    %2201 = vmatpush.msra.mxu0 0.0
    %2202 = vmatpush.msra.mxu0 0.0
    %2203 = vmatpush.msra.mxu0 0.0
    %2204 = vmatpush.msra.mxu0 0.0
    %2205 = vmatpush.msra.mxu0 0.0
    %2206 = vmatpush.msra.mxu0 %v1959
    %2207 = vmatpush.msra.mxu0 %v1956
    %2208 = vmatmul.f32.gmra.mxu0 %v1970
    %v2209 = vpop.f32.mrf.mxu0
    %v2210 = vadd.f32 %v2190, %v2209
    %2211 = vdwg.mxu0
    %v2212 = vmax.f32 %v2050, 0.0
    %v2213 = vmax.f32 %v2130, 0.0
    %v2214 = vmax.f32 %v2210, 0.0
    %v2215 = vld [vmem:[%s11] sm:$0xff]
    %v2216 = vld [vmem:[%s11 + $0x8] sm:$0xff]
    %v2217 = vld [vmem:[%s11 + $0x10] sm:$0xff]
    %v2218 = vld [vmem:[%s11 + $0x18] sm:$0xff]
    %v2219 = vld [vmem:[%s11 + $0x20] sm:$0xff]
    %v2220 = vld [vmem:[%s11 + $0x28] sm:$0xff]
    %v2221 = vld [vmem:[%s11 + $0x30] sm:$0xff]
    %v2222 = vld [vmem:[%s11 + $0x38] sm:$0xff]
    %v2223 = vld [vmem:[%s11 + $0x40] sm:$0xff]
    %v2224 = vld [vmem:[%s11 + $0x48] sm:$0xff]
    %v2225 = vld [vmem:[%s11 + $0x50] sm:$0xff]
    %v2226 = vld [vmem:[%s11 + $0x58] sm:$0xff]
    %v2227 = vld [vmem:[%s11 + $0x60] sm:$0xff]
    %v2228 = vld [vmem:[%s11 + $0x68] sm:$0xff]
    %v2229 = vld [vmem:[%s11 + $0x70] sm:$0xff]
    %v2230 = vld [vmem:[%s11 + $0x78] sm:$0xff]
    %v2231 = vld [vmem:[%s11 + $0x80] sm:$0xff]
    %v2232 = vld [vmem:[%s11 + $0x88] sm:$0xff]
    %v2233 = vld [vmem:[%s11 + $0x90] sm:$0xff]
    %v2234 = vld [vmem:[%s11 + $0x98] sm:$0xff]
    %v2235 = vld [vmem:[%s11 + $0xa0] sm:$0xff]
    %v2236 = vld [vmem:[%s11 + $0xa8] sm:$0xff]
    %v2237 = vld [vmem:[%s11 + $0xb0] sm:$0xff]
    %v2238 = vld [vmem:[%s11 + $0xb8] sm:$0xff]
    %v2239 = vld [vmem:[%s11 + $0xc0] sm:$0xff]
    %v2240 = vld [vmem:[%s11 + $0xc8] sm:$0xff]
    %v2241 = vld [vmem:[%s11 + $0xd0] sm:$0xff]
    %v2242 = vld [vmem:[%s11 + $0xd8] sm:$0xff]
    %v2243 = vld [vmem:[%s11 + $0xe0] sm:$0xff]
    %v2244 = vld [vmem:[%s11 + $0xe8] sm:$0xff]
    %v2245 = vld [vmem:[%s11 + $0xf0] sm:$0xff]
    %v2246 = vld [vmem:[%s11 + $0xf8] sm:$0xff]
    %v2247 = vld [vmem:[%s11 + $0x100] sm:$0xff]
    %v2248 = vld [vmem:[%s11 + $0x108] sm:$0xff]
    %v2249 = vld [vmem:[%s11 + $0x110] sm:$0xff]
    %v2250 = vld [vmem:[%s11 + $0x118] sm:$0xff]
    %v2251 = vld [vmem:[%s11 + $0x120] sm:$0xff]
    %v2252 = vld [vmem:[%s11 + $0x128] sm:$0xf]
    %v2253 = vld [vmem:[%s12] sm:$0x1]
    %v2255 = vperm.slane %v2253, 0
    %vm2257 = vcmask 359424
    %v2259 = vsel %vm2257, %v2214, 0
    %v2262 = vsel %vm1234, %v2252, 0
    %2264 = vmatpush.msra.mxu0 %v2230
    %2265 = vmatpush.msra.mxu0 %v2229
    %2266 = vmatpush.msra.mxu0 %v2228
    %2267 = vmatpush.msra.mxu0 %v2227
    %2268 = vmatpush.msra.mxu0 %v2226
    %2269 = vmatpush.msra.mxu0 %v2225
    %2270 = vmatpush.msra.mxu0 %v2224
    %2271 = vmatpush.msra.mxu0 %v2223
    %2272 = vmatpush.msra.mxu0 %v2222
    %2273 = vmatpush.msra.mxu0 %v2221
    %2274 = vmatpush.msra.mxu0 %v2220
    %2275 = vmatpush.msra.mxu0 %v2219
    %2276 = vmatpush.msra.mxu0 %v2218
    %2277 = vmatpush.msra.mxu0 %v2217
    %2278 = vmatpush.msra.mxu0 %v2216
    %2279 = vmatpush.msra.mxu0 %v2215
    %2280 = vmatmul.f32.gmra.mxu0 %v2212
    %v2281 = vpop.f32.mrf.mxu0
    %v2282 = vadd.f32 %v2255, %v2281
    %2283 = vdwg.mxu0
    %2284 = vmatpush.msra.mxu0 %v2246
    %2285 = vmatpush.msra.mxu0 %v2245
    %2286 = vmatpush.msra.mxu0 %v2244
    %2287 = vmatpush.msra.mxu0 %v2243
    %2288 = vmatpush.msra.mxu0 %v2242
    %2289 = vmatpush.msra.mxu0 %v2241
    %2290 = vmatpush.msra.mxu0 %v2240
    %2291 = vmatpush.msra.mxu0 %v2239
    %2292 = vmatpush.msra.mxu0 %v2238
    %2293 = vmatpush.msra.mxu0 %v2237
    %2294 = vmatpush.msra.mxu0 %v2236
    %2295 = vmatpush.msra.mxu0 %v2235
    %2296 = vmatpush.msra.mxu0 %v2234
    %2297 = vmatpush.msra.mxu0 %v2233
    %2298 = vmatpush.msra.mxu0 %v2232
    %2299 = vmatpush.msra.mxu0 %v2231
    %2300 = vmatmul.f32.gmra.mxu0 %v2213
    %v2301 = vpop.f32.mrf.mxu0
    %v2302 = vadd.f32 %v2282, %v2301
    %2303 = vdwg.mxu0
    %2304 = vmatpush.msra.mxu0 0.0
    %2305 = vmatpush.msra.mxu0 0.0
    %2306 = vmatpush.msra.mxu0 0.0
    %2307 = vmatpush.msra.mxu0 0.0
    %2308 = vmatpush.msra.mxu0 0.0
    %2309 = vmatpush.msra.mxu0 0.0
    %2310 = vmatpush.msra.mxu0 0.0
    %2311 = vmatpush.msra.mxu0 0.0
    %2312 = vmatpush.msra.mxu0 0.0
    %2313 = vmatpush.msra.mxu0 0.0
    %2314 = vmatpush.msra.mxu0 %v2262
    %2315 = vmatpush.msra.mxu0 %v2251
    %2316 = vmatpush.msra.mxu0 %v2250
    %2317 = vmatpush.msra.mxu0 %v2249
    %2318 = vmatpush.msra.mxu0 %v2248
    %2319 = vmatpush.msra.mxu0 %v2247
    %2320 = vmatmul.f32.gmra.mxu0 %v2259
    %v2321 = vpop.f32.mrf.mxu0
    %v2322 = vadd.f32 %v2302, %v2321
    %2323 = vdwg.mxu0
    %v2324 = vtanh.pop %v2322
    %vm2325 = vcmask 9216
    %2326 = vst.msk [vmem:[#allocation3] sm:$0x3] %vm2325, %v2324
    // Predicated region
    $region54: #{actor_forward.1} parent=1 // pred_check
      _
    $region55: #{actor_forward.1} parent=1 // pred_check_branch
      %2328 = sbr.rel (0) target = $region57
    $region56: #{actor_forward.1} parent=1 // pred_region
      %2330 = vsyncadd [#allocation4], 0
      %s2332 = sshll.u32 [#allocation3], 4
      %s2333 = int_to_ptr.vmem [resolvable:$true] %s2332
      %s2334 = sshll.u32 %s13, 4
      %s2335 = int_to_ptr.hbm [resolvable:$true] %s2334
      %2337 = dma.vmem_to_hbm [thread:$0]  %s2333, 32, %s2335, [#allocation4]
    $region57: #{actor_forward.1} parent=1 // pred_fallthru
      _
    // Predicated region
    $region58: #{actor_forward.1} parent=1 // pred_check
      _
    $region59: #{actor_forward.1} parent=1 // pred_check_branch
      %2339 = sbr.rel (0) target = $region61
    $region60: #{actor_forward.1} parent=1 // pred_region
      %2341 = dma.done [#allocation4], 32
    $region61: #{actor_forward.1} parent=1 // pred_fallthru
      _
    %2342 = vsyncpa [#allocation4], 1

</llo_original>
